<compile_context>
chip_gen: v5e
topology: v5e:2x2
jax: 0.10.0
libtpu: 0.0.40
codegen_flags: <defaults>
</compile_context>

<pallas_src>
import jax
import jax.numpy as jnp
from jax.experimental import pallas as pl
from jax.experimental.pallas import tpu as pltpu

_PAD = 128          # lane-padded width for all hidden layers and the output
_NEG_INF = -1e30    # bias fill for padded output logits -> exp() == 0


def _binned_regressor_kernel(x_ref,
                             w0_ref, b0_ref,
                             w1_ref, b1_ref,
                             w2_ref, b2_ref,
                             w3_ref, b3_ref,
                             o_ref):
    """Fused MLP + softmax for one batch tile (f32 MXU/VPU, 128-lane padded)."""
    x = x_ref[...].astype(jnp.float32)

    # Hoist the (1, 128) bias rows; each is broadcast exactly once below.
    b0 = b0_ref[...]
    b1 = b1_ref[...]
    b2 = b2_ref[...]
    b3 = b3_ref[...]

    # Layer 0.  For n_in == 1 the contraction is degenerate (K=1): do the outer
    # product on the VPU via broadcasting instead of pushing a matmul through
    # the MXU.  (Trace-time branch; shapes are static.)
    if x_ref.shape[1] == 1:
        h = x * w0_ref[...] + b0                      # (t,1)*(1,128) -> (t,128)
    else:
        h = jnp.dot(x, w0_ref[...], preferred_element_type=jnp.float32) + b0
    h = jnp.maximum(h, 0.0)

    # Layers 1 and 2: Linear (padded to 128x128) + ReLU on the MXU.
    h = jnp.maximum(
        jnp.dot(h, w1_ref[...], preferred_element_type=jnp.float32) + b1, 0.0)
    h = jnp.maximum(
        jnp.dot(h, w2_ref[...], preferred_element_type=jnp.float32) + b2, 0.0)

    # Final layer: Linear + Softmax over 128 padded lanes.  Padded logits are
    # ~-1e30 (zero weight + -1e30 bias) so they contribute 0 to the sum.
    z = jnp.dot(h, w3_ref[...], preferred_element_type=jnp.float32) + b3
    z = z - jnp.max(z, axis=-1, keepdims=True)
    e = jnp.exp(z)
    inv = pl.reciprocal(jnp.sum(e, axis=-1, keepdims=True), approx=True)
    o_ref[...] = (e * inv).astype(o_ref.dtype)


def _pad2(a, rows, cols, fill=0.0):
    a = a.astype(jnp.float32)
    return jnp.pad(a, ((0, rows - a.shape[0]), (0, cols - a.shape[1])),
                   constant_values=fill)


def binned_regressor_forward(x, params, *, batch_tile=256):
    """x: (B, n_in) f32.  params: dict of weights (in,out) and biases (1,out)."""
    B, n_in = x.shape
    n_out = params["w3"].shape[1]

    bt = min(batch_tile, B)
    # Pad the batch so the grid tiles it exactly (padded rows are discarded).
    B_pad = ((B + bt - 1) // bt) * bt
    if B_pad != B:
        x = jnp.pad(x, ((0, B_pad - B), (0, 0)))

    # Zero-pad every layer to 128 output lanes (and 128 input rows where the
    # preceding layer was padded).  Padded hidden units stay exactly 0 through
    # the ReLUs; padded output logits get a -1e30 bias so softmax ignores them.
    w0p = _pad2(params["w0"], n_in, _PAD)
    b0p = _pad2(params["b0"], 1, _PAD)
    w1p = _pad2(params["w1"], _PAD, _PAD)
    b1p = _pad2(params["b1"], 1, _PAD)
    w2p = _pad2(params["w2"], _PAD, _PAD)
    b2p = _pad2(params["b2"], 1, _PAD)
    w3p = _pad2(params["w3"], _PAD, _PAD)
    b3p = _pad2(params["b3"], 1, _PAD, fill=_NEG_INF)
    weight_args = (w0p, b0p, w1p, b1p, w2p, b2p, w3p, b3p)

    def full_spec(a):
        # Grid-invariant operand: same (0, 0) block every step -> single DMA.
        return pl.BlockSpec(a.shape, lambda i: (0, 0))

    in_specs = [pl.BlockSpec((bt, n_in), lambda i: (i, 0))]
    in_specs += [full_spec(a) for a in weight_args]
    out_spec = pl.BlockSpec((bt, _PAD), lambda i: (i, 0))   # lane-dense store

    fn = pl.pallas_call(
        _binned_regressor_kernel,
        out_shape=jax.ShapeDtypeStruct((B_pad, _PAD), jnp.float32),
        grid_spec=pltpu.PrefetchScalarGridSpec(
            num_scalar_prefetch=0,
            grid=(B_pad // bt,),
            in_specs=in_specs,
            out_specs=out_spec,
        ),
        compiler_params=pltpu.CompilerParams(
            dimension_semantics=("parallel",)),
    )
    out = fn(x, *weight_args)
    return out[:B, :n_out]


def init_params(key, n_in=1, layers=(32, 64, 128), n_bins_edges=17):
    """Deterministic init mirroring torch.nn.Linear default (U[-1/sqrt(fan_in), +])."""
    dims = [n_in] + list(layers) + [n_bins_edges - 1]
    params = {}
    for li, (fi, fo) in enumerate(zip(dims[:-1], dims[1:])):
        key, kw, kb = jax.random.split(key, 3)
        bound = 1.0 / jnp.sqrt(jnp.float32(fi))
        # stored as (in_features, out_features) == torch weight transposed
        params[f"w{li}"] = jax.random.uniform(kw, (fi, fo), jnp.float32, -bound, bound)
        params[f"b{li}"] = jax.random.uniform(kb, (1, fo), jnp.float32, -bound, bound)
    return params


def ref_forward(x, p):
    h = x
    for li in range(3):
        h = jnp.maximum(h @ p[f"w{li}"] + p[f"b{li}"], 0.0)
    z = h @ p["w3"] + p["b3"]
    return jax.nn.softmax(z, axis=-1)


if __name__ == "__main__":
    key = jax.random.PRNGKey(0)
    k_params, k_x = jax.random.split(key)

    n_in = 1
    layers = (32, 64, 128)
    bins = jnp.linspace(0.0, 1.0, 17)          # buffer `bins`; len(bins)-1 = 16 classes
    params = init_params(k_params, n_in=n_in, layers=layers, n_bins_edges=bins.shape[0])

    B = 512
    x = jax.random.uniform(k_x, (B, n_in), jnp.float32)

    # batch_tile=256 -> grid=(2,): large tiles to amortize per-step overhead,
    # while keeping two steps so both v7x TensorCores get a share.
    out = binned_regressor_forward(x, params, batch_tile=256)
    out = jax.block_until_ready(out)

    # Sanity checks: shape, softmax normalization, and pure-JAX reference.
    # Tolerances are 1e-3 because the softmax denominator uses the EUP approx
    # reciprocal (relative error ~2e-4).
    assert out.shape == (B, bins.shape[0] - 1)
    row_sums = jnp.sum(out, axis=-1)
    assert jnp.allclose(row_sums, 1.0, atol=1e-3)

    ref = ref_forward(x, params)
    assert jnp.allclose(out, ref, atol=1e-3, rtol=1e-3)

    print("KERNEL_OK")
</pallas_src>

<mosaic_0001>
module attributes {stable_mosaic.version = 11 : i64} {
  func.func @_binned_regressor_kernel(%arg0: i32, %arg1: memref<256x1xf32, #tpu.memory_space<vmem>>, %arg2: memref<1x128xf32, #tpu.memory_space<vmem>>, %arg3: memref<1x128xf32, #tpu.memory_space<vmem>>, %arg4: memref<128x128xf32, #tpu.memory_space<vmem>>, %arg5: memref<1x128xf32, #tpu.memory_space<vmem>>, %arg6: memref<128x128xf32, #tpu.memory_space<vmem>>, %arg7: memref<1x128xf32, #tpu.memory_space<vmem>>, %arg8: memref<128x128xf32, #tpu.memory_space<vmem>>, %arg9: memref<1x128xf32, #tpu.memory_space<vmem>>, %arg10: memref<256x128xf32, #tpu.memory_space<vmem>>) attributes {dimension_semantics = [#tpu.dimension_semantics<parallel>], iteration_bounds = array<i64: 2>, scalar_prefetch = 0 : i64, scratch_operands = 0 : i64, tpu.core_type = #tpu.core_type<tc>, window_params = [{transform_indices = @transform_0, window_bounds = array<i64: 256, 1>}, {pipeline_mode = #tpu.pipeline_mode<synchronous>, transform_indices = @transform_1, window_bounds = array<i64: 1, 128>}, {pipeline_mode = #tpu.pipeline_mode<synchronous>, transform_indices = @transform_2, window_bounds = array<i64: 1, 128>}, {pipeline_mode = #tpu.pipeline_mode<synchronous>, transform_indices = @transform_3, window_bounds = array<i64: 128, 128>}, {pipeline_mode = #tpu.pipeline_mode<synchronous>, transform_indices = @transform_4, window_bounds = array<i64: 1, 128>}, {pipeline_mode = #tpu.pipeline_mode<synchronous>, transform_indices = @transform_5, window_bounds = array<i64: 128, 128>}, {pipeline_mode = #tpu.pipeline_mode<synchronous>, transform_indices = @transform_6, window_bounds = array<i64: 1, 128>}, {pipeline_mode = #tpu.pipeline_mode<synchronous>, transform_indices = @transform_7, window_bounds = array<i64: 128, 128>}, {pipeline_mode = #tpu.pipeline_mode<synchronous>, transform_indices = @transform_8, window_bounds = array<i64: 1, 128>}, {transform_indices = @transform_9, window_bounds = array<i64: 256, 128>}]} {
    %c0 = arith.constant 0 : index
    %c0_0 = arith.constant 0 : index
    %0 = vector.load %arg1[%c0, %c0_0] : memref<256x1xf32, #tpu.memory_space<vmem>>, vector<256x1xf32>
    %c0_1 = arith.constant 0 : index
    %c0_2 = arith.constant 0 : index
    %1 = vector.load %arg3[%c0_1, %c0_2] : memref<1x128xf32, #tpu.memory_space<vmem>>, vector<1x128xf32>
    %c0_3 = arith.constant 0 : index
    %c0_4 = arith.constant 0 : index
    %2 = vector.load %arg5[%c0_3, %c0_4] : memref<1x128xf32, #tpu.memory_space<vmem>>, vector<1x128xf32>
    %c0_5 = arith.constant 0 : index
    %c0_6 = arith.constant 0 : index
    %3 = vector.load %arg7[%c0_5, %c0_6] : memref<1x128xf32, #tpu.memory_space<vmem>>, vector<1x128xf32>
    %c0_7 = arith.constant 0 : index
    %c0_8 = arith.constant 0 : index
    %4 = vector.load %arg9[%c0_7, %c0_8] : memref<1x128xf32, #tpu.memory_space<vmem>>, vector<1x128xf32>
    %c0_9 = arith.constant 0 : index
    %c0_10 = arith.constant 0 : index
    %5 = vector.load %arg2[%c0_9, %c0_10] : memref<1x128xf32, #tpu.memory_space<vmem>>, vector<1x128xf32>
    %6 = vector.broadcast %0 : vector<256x1xf32> to vector<256x128xf32>
    %7 = vector.broadcast %5 : vector<1x128xf32> to vector<256x128xf32>
    %8 = arith.mulf %6, %7 : vector<256x128xf32>
    %9 = vector.broadcast %1 : vector<1x128xf32> to vector<256x128xf32>
    %10 = arith.addf %8, %9 : vector<256x128xf32>
    %cst = arith.constant 0.000000e+00 : f32
    %11 = vector.broadcast %cst : f32 to vector<256x128xf32>
    %12 = arith.maximumf %10, %11 : vector<256x128xf32>
    %c0_11 = arith.constant 0 : index
    %c0_12 = arith.constant 0 : index
    %13 = vector.load %arg4[%c0_11, %c0_12] : memref<128x128xf32, #tpu.memory_space<vmem>>, vector<128x128xf32>
    %cst_13 = arith.constant dense<0.000000e+00> : vector<256x128xf32>
    %14 = tpu.matmul %12, %13, %cst_13 {dimension_numbers = #tpu.dot_dimension_numbers<[1], [0], [0], [1], [0, 0, 1, 1], [], []>} : vector<256x128xf32>, vector<128x128xf32>, vector<256x128xf32> -> vector<256x128xf32>
    %15 = vector.broadcast %2 : vector<1x128xf32> to vector<256x128xf32>
    %16 = arith.addf %14, %15 : vector<256x128xf32>
    %cst_14 = arith.constant 0.000000e+00 : f32
    %17 = vector.broadcast %cst_14 : f32 to vector<256x128xf32>
    %18 = arith.maximumf %16, %17 : vector<256x128xf32>
    %c0_15 = arith.constant 0 : index
    %c0_16 = arith.constant 0 : index
    %19 = vector.load %arg6[%c0_15, %c0_16] : memref<128x128xf32, #tpu.memory_space<vmem>>, vector<128x128xf32>
    %cst_17 = arith.constant dense<0.000000e+00> : vector<256x128xf32>
    %20 = tpu.matmul %18, %19, %cst_17 {dimension_numbers = #tpu.dot_dimension_numbers<[1], [0], [0], [1], [0, 0, 1, 1], [], []>} : vector<256x128xf32>, vector<128x128xf32>, vector<256x128xf32> -> vector<256x128xf32>
    %21 = vector.broadcast %3 : vector<1x128xf32> to vector<256x128xf32>
    %22 = arith.addf %20, %21 : vector<256x128xf32>
    %cst_18 = arith.constant 0.000000e+00 : f32
    %23 = vector.broadcast %cst_18 : f32 to vector<256x128xf32>
    %24 = arith.maximumf %22, %23 : vector<256x128xf32>
    %c0_19 = arith.constant 0 : index
    %c0_20 = arith.constant 0 : index
    %25 = vector.load %arg8[%c0_19, %c0_20] : memref<128x128xf32, #tpu.memory_space<vmem>>, vector<128x128xf32>
    %cst_21 = arith.constant dense<0.000000e+00> : vector<256x128xf32>
    %26 = tpu.matmul %24, %25, %cst_21 {dimension_numbers = #tpu.dot_dimension_numbers<[1], [0], [0], [1], [0, 0, 1, 1], [], []>} : vector<256x128xf32>, vector<128x128xf32>, vector<256x128xf32> -> vector<256x128xf32>
    %27 = vector.broadcast %4 : vector<1x128xf32> to vector<256x128xf32>
    %28 = arith.addf %26, %27 : vector<256x128xf32>
    %cst_22 = arith.constant dense<0xFF800000> : vector<256xf32>
    %29 = vector.multi_reduction <maximumf>, %28, %cst_22 [1] : vector<256x128xf32> to vector<256xf32>
    %30 = vector.shape_cast %29 : vector<256xf32> to vector<256x1xf32>
    %31 = vector.broadcast %30 : vector<256x1xf32> to vector<256x128xf32>
    %32 = arith.subf %28, %31 : vector<256x128xf32>
    %33 = math.exp %32 : vector<256x128xf32>
    %cst_23 = arith.constant dense<0.000000e+00> : vector<256xf32>
    %34 = vector.multi_reduction <add>, %33, %cst_23 [1] : vector<256x128xf32> to vector<256xf32>
    %35 = vector.shape_cast %34 : vector<256xf32> to vector<256x1xf32>
    %36 = tpu.reciprocal %35 {approx = true} : vector<256x1xf32> -> vector<256x1xf32>
    %37 = vector.broadcast %36 : vector<256x1xf32> to vector<256x128xf32>
    %38 = arith.mulf %33, %37 : vector<256x128xf32>
    %c0_24 = arith.constant 0 : index
    %c0_25 = arith.constant 0 : index
    %39 = vector.load %arg10[%c0_24, %c0_25] : memref<256x128xf32, #tpu.memory_space<vmem>>, vector<256x128xf32>
    tpu.vector_store %arg10[%c0_24, %c0_25], %38 {strides = array<i32>} : memref<256x128xf32, #tpu.memory_space<vmem>>, vector<256x128xf32>,
    return
  }
  func.func @transform_0(%arg0: i32) -> (i32, i32) {
    %c0_i32 = arith.constant 0 : i32
    %c0_i32_0 = arith.constant 0 : i32
    return %arg0, %c0_i32 : i32, i32
  }
  func.func @transform_1(%arg0: i32) -> (i32, i32) {
    %c0_i32 = arith.constant 0 : i32
    %c0_i32_0 = arith.constant 0 : i32
    %c0_i32_1 = arith.constant 0 : i32
    return %c0_i32, %c0_i32_0 : i32, i32
  }
  func.func @transform_2(%arg0: i32) -> (i32, i32) {
    %c0_i32 = arith.constant 0 : i32
    %c0_i32_0 = arith.constant 0 : i32
    %c0_i32_1 = arith.constant 0 : i32
    return %c0_i32, %c0_i32_0 : i32, i32
  }
  func.func @transform_3(%arg0: i32) -> (i32, i32) {
    %c0_i32 = arith.constant 0 : i32
    %c0_i32_0 = arith.constant 0 : i32
    %c0_i32_1 = arith.constant 0 : i32
    return %c0_i32, %c0_i32_0 : i32, i32
  }
  func.func @transform_4(%arg0: i32) -> (i32, i32) {
    %c0_i32 = arith.constant 0 : i32
    %c0_i32_0 = arith.constant 0 : i32
    %c0_i32_1 = arith.constant 0 : i32
    return %c0_i32, %c0_i32_0 : i32, i32
  }
  func.func @transform_5(%arg0: i32) -> (i32, i32) {
    %c0_i32 = arith.constant 0 : i32
    %c0_i32_0 = arith.constant 0 : i32
    %c0_i32_1 = arith.constant 0 : i32
    return %c0_i32, %c0_i32_0 : i32, i32
  }
  func.func @transform_6(%arg0: i32) -> (i32, i32) {
    %c0_i32 = arith.constant 0 : i32
    %c0_i32_0 = arith.constant 0 : i32
    %c0_i32_1 = arith.constant 0 : i32
    return %c0_i32, %c0_i32_0 : i32, i32
  }
  func.func @transform_7(%arg0: i32) -> (i32, i32) {
    %c0_i32 = arith.constant 0 : i32
    %c0_i32_0 = arith.constant 0 : i32
    %c0_i32_1 = arith.constant 0 : i32
    return %c0_i32, %c0_i32_0 : i32, i32
  }
  func.func @transform_8(%arg0: i32) -> (i32, i32) {
    %c0_i32 = arith.constant 0 : i32
    %c0_i32_0 = arith.constant 0 : i32
    %c0_i32_1 = arith.constant 0 : i32
    return %c0_i32, %c0_i32_0 : i32, i32
  }
  func.func @transform_9(%arg0: i32) -> (i32, i32) {
    %c0_i32 = arith.constant 0 : i32
    %c0_i32_0 = arith.constant 0 : i32
    return %arg0, %c0_i32 : i32, i32
  }
}

</mosaic_0001>

<llo_original>
// kernel: tpu_custom_call.1
$region0: #{tpu_custom_call.1}
  #allocation0 [shape = 'u32[]', space=smem, size = 0x4, offset = 0x4, fixed_abs, tag = 'smem constant byte address 0x4 - core index']
  #allocation1 [shape = 'u32[72,128]{1,0:T(1,128)}', space=vmem, size = 0x9000, scoped, tag = 'internal scratch']
  %s0 = inlined_call_operand.vmem [shape: f32[512,1], index: 0, kind: input, shape index: {}]
  %s1 = inlined_call_operand.vmem [shape: f32[1,128], index: 1, kind: input, shape index: {}]
  %s2 = inlined_call_operand.vmem [shape: f32[1,128], index: 2, kind: input, shape index: {}]
  %s3 = inlined_call_operand.vmem [shape: f32[128,128], index: 3, kind: input, shape index: {}]
  %s4 = inlined_call_operand.vmem [shape: f32[1,128], index: 4, kind: input, shape index: {}]
  %s5 = inlined_call_operand.vmem [shape: f32[128,128], index: 5, kind: input, shape index: {}]
  %s6 = inlined_call_operand.vmem [shape: f32[1,128], index: 6, kind: input, shape index: {}]
  %s7 = inlined_call_operand.vmem [shape: f32[128,128], index: 7, kind: input, shape index: {}]
  %s8 = inlined_call_operand.vmem [shape: f32[1,128], index: 8, kind: input, shape index: {}]
  %s9 = inlined_call_operand.hbm [shape: f32[512,128], index: 9, kind: output, shape index: {}]
  %s10 = sld [smem:[#allocation0]]
  $region69: #{tpu_custom_call.1} parent=0
    _
  %s12 = ssub.s32 1, %s10
  %s13 = scalar_select 0, %s12, %s10
  $region1: #{tpu_custom_call.1} parent=0
    #allocation2 [shape = 'u8[262144]{0}', space=vmem, size = 0x40000, scoped, tag = 'output window, operand 0']
    #allocation3 [shape = 's32[2]{0}', space=sflag, size = 0x8, scoped, tag = 'scoped memory for tpu_custom_call.1']
    %14 = vsyncpa [#allocation3], 0
    %s15 = scalar_lea.sflag [#allocation3], 1
    %16 = vsyncpa %s15, 0
    loop: start=0, step=1, limit=4
    $region2: #{tpu_custom_call.1} parent=1 // loop_pre_header
      _
    $region3: #{tpu_custom_call.1} parent=1 // loop_header
      %s18 = sphi 0, %s22
      %p19 = scmp.ge.s32.totalorder %s18, 4
      %s28 = sphi 0, %s30
      %s31 = sphi 0, %s28
      %s32 = sphi 0, %s31
      %s48 = sphi 0, %s32
      %s52 = sphi 0, %s52
      %s54 = sphi 0, %s52
      %s55 = sphi 0, %s54
      %s69 = sphi 0, %s55
      %s73 = sphi 0, %s73
      %s75 = sphi 0, %s73
      %s76 = sphi 0, %s75
      %s90 = sphi 0, %s76
      %s94 = sphi 0, %s94
      %s96 = sphi 0, %s94
      %s97 = sphi 0, %s96
      %s111 = sphi 0, %s97
      %s115 = sphi 0, %s115
      %s117 = sphi 0, %s115
      %s118 = sphi 0, %s117
      %s132 = sphi 0, %s118
      %s136 = sphi 0, %s136
      %s138 = sphi 0, %s136
      %s139 = sphi 0, %s138
      %s153 = sphi 0, %s139
      %s157 = sphi 0, %s157
      %s159 = sphi 0, %s157
      %s160 = sphi 0, %s159
      %s174 = sphi 0, %s160
      %s178 = sphi 0, %s178
      %s180 = sphi 0, %s178
      %s181 = sphi 0, %s180
      %s195 = sphi 0, %s181
      %s199 = sphi 0, %s199
      %s201 = sphi 0, %s199
      %s202 = sphi 0, %s201
      %s216 = sphi 0, %s202
      %s222 = sphi 0, %s224
      %s225 = sphi 0, %s222
      %s226 = sphi 0, %s225
      %s242 = sphi 0, %s226
    $region4: #{tpu_custom_call.1} parent=1 // loop_header_branch
      %21 = sbr.rel (%p19) target = $region8
    $region5: #{tpu_custom_call.1} parent=1 // loop_body
      %s23 = ssub.s32 %s18, 1
      %s24 = ssub.s32 %s18, 2
      %s25 = sadd.s32 %s18, 1
      %s26 = ssub.s32 %s18, %s25
      %p27 = scmp.eq.s32.totalorder %s26, 0
      %s29 = sadd.s32 %s28, 1
      %s30 = scalar_select %p27, %s28, %s29
      %p33 = pneg %p27
      %p34 = scmp.eq.s32.totalorder %s18, 1
      %p35 = por %p33, %p34
      %p36 = scmp.ne.s32.totalorder %s28, %s31
      %p37 = scmp.eq.s32.totalorder %s18, 0
      %p38 = por %p36, %p37
      %p39 = scmp.ne.s32.totalorder %s28, %s31
      %p40 = scmp.eq.s32.totalorder %s23, 1
      %p41 = por %p39, %p40
      %p42 = scmp.ne.s32.totalorder %s31, %s32
      %p43 = scmp.eq.s32.totalorder %s23, 0
      %p44 = por %p42, %p43
      %p45 = scmp.ne.s32.totalorder %s31, %s32
      %p46 = scmp.eq.s32.totalorder %s24, 1
      %p47 = por %p45, %p46
      %p49 = scmp.ne.s32.totalorder %s32, %s48
      %p50 = scmp.eq.s32.totalorder %s24, 0
      %p51 = por %p49, %p50
      %s53 = sadd.s32 %s52, 1
      %p56 = scmp.eq.s32.totalorder %s18, 1
      %p57 = scmp.ne.s32.totalorder %s52, %s54
      %p58 = scmp.eq.s32.totalorder %s18, 0
      %p59 = por %p57, %p58
      %p60 = scmp.ne.s32.totalorder %s52, %s54
      %p61 = scmp.eq.s32.totalorder %s23, 1
      %p62 = por %p60, %p61
      %p63 = scmp.ne.s32.totalorder %s54, %s55
      %p64 = scmp.eq.s32.totalorder %s23, 0
      %p65 = por %p63, %p64
      %p66 = scmp.ne.s32.totalorder %s54, %s55
      %p67 = scmp.eq.s32.totalorder %s24, 1
      %p68 = por %p66, %p67
      %p70 = scmp.ne.s32.totalorder %s55, %s69
      %p71 = scmp.eq.s32.totalorder %s24, 0
      %p72 = por %p70, %p71
      %s74 = sadd.s32 %s73, 1
      %p77 = scmp.eq.s32.totalorder %s18, 1
      %p78 = scmp.ne.s32.totalorder %s73, %s75
      %p79 = scmp.eq.s32.totalorder %s18, 0
      %p80 = por %p78, %p79
      %p81 = scmp.ne.s32.totalorder %s73, %s75
      %p82 = scmp.eq.s32.totalorder %s23, 1
      %p83 = por %p81, %p82
      %p84 = scmp.ne.s32.totalorder %s75, %s76
      %p85 = scmp.eq.s32.totalorder %s23, 0
      %p86 = por %p84, %p85
      %p87 = scmp.ne.s32.totalorder %s75, %s76
      %p88 = scmp.eq.s32.totalorder %s24, 1
      %p89 = por %p87, %p88
      %p91 = scmp.ne.s32.totalorder %s76, %s90
      %p92 = scmp.eq.s32.totalorder %s24, 0
      %p93 = por %p91, %p92
      %s95 = sadd.s32 %s94, 1
      %p98 = scmp.eq.s32.totalorder %s18, 1
      %p99 = scmp.ne.s32.totalorder %s94, %s96
      %p100 = scmp.eq.s32.totalorder %s18, 0
      %p101 = por %p99, %p100
      %p102 = scmp.ne.s32.totalorder %s94, %s96
      %p103 = scmp.eq.s32.totalorder %s23, 1
      %p104 = por %p102, %p103
      %p105 = scmp.ne.s32.totalorder %s96, %s97
      %p106 = scmp.eq.s32.totalorder %s23, 0
      %p107 = por %p105, %p106
      %p108 = scmp.ne.s32.totalorder %s96, %s97
      %p109 = scmp.eq.s32.totalorder %s24, 1
      %p110 = por %p108, %p109
      %p112 = scmp.ne.s32.totalorder %s97, %s111
      %p113 = scmp.eq.s32.totalorder %s24, 0
      %p114 = por %p112, %p113
      %s116 = sadd.s32 %s115, 1
      %p119 = scmp.eq.s32.totalorder %s18, 1
      %p120 = scmp.ne.s32.totalorder %s115, %s117
      %p121 = scmp.eq.s32.totalorder %s18, 0
      %p122 = por %p120, %p121
      %p123 = scmp.ne.s32.totalorder %s115, %s117
      %p124 = scmp.eq.s32.totalorder %s23, 1
      %p125 = por %p123, %p124
      %p126 = scmp.ne.s32.totalorder %s117, %s118
      %p127 = scmp.eq.s32.totalorder %s23, 0
      %p128 = por %p126, %p127
      %p129 = scmp.ne.s32.totalorder %s117, %s118
      %p130 = scmp.eq.s32.totalorder %s24, 1
      %p131 = por %p129, %p130
      %p133 = scmp.ne.s32.totalorder %s118, %s132
      %p134 = scmp.eq.s32.totalorder %s24, 0
      %p135 = por %p133, %p134
      %s137 = sadd.s32 %s136, 1
      %p140 = scmp.eq.s32.totalorder %s18, 1
      %p141 = scmp.ne.s32.totalorder %s136, %s138
      %p142 = scmp.eq.s32.totalorder %s18, 0
      %p143 = por %p141, %p142
      %p144 = scmp.ne.s32.totalorder %s136, %s138
      %p145 = scmp.eq.s32.totalorder %s23, 1
      %p146 = por %p144, %p145
      %p147 = scmp.ne.s32.totalorder %s138, %s139
      %p148 = scmp.eq.s32.totalorder %s23, 0
      %p149 = por %p147, %p148
      %p150 = scmp.ne.s32.totalorder %s138, %s139
      %p151 = scmp.eq.s32.totalorder %s24, 1
      %p152 = por %p150, %p151
      %p154 = scmp.ne.s32.totalorder %s139, %s153
      %p155 = scmp.eq.s32.totalorder %s24, 0
      %p156 = por %p154, %p155
      %s158 = sadd.s32 %s157, 1
      %p161 = scmp.eq.s32.totalorder %s18, 1
      %p162 = scmp.ne.s32.totalorder %s157, %s159
      %p163 = scmp.eq.s32.totalorder %s18, 0
      %p164 = por %p162, %p163
      %p165 = scmp.ne.s32.totalorder %s157, %s159
      %p166 = scmp.eq.s32.totalorder %s23, 1
      %p167 = por %p165, %p166
      %p168 = scmp.ne.s32.totalorder %s159, %s160
      %p169 = scmp.eq.s32.totalorder %s23, 0
      %p170 = por %p168, %p169
      %p171 = scmp.ne.s32.totalorder %s159, %s160
      %p172 = scmp.eq.s32.totalorder %s24, 1
      %p173 = por %p171, %p172
      %p175 = scmp.ne.s32.totalorder %s160, %s174
      %p176 = scmp.eq.s32.totalorder %s24, 0
      %p177 = por %p175, %p176
      %s179 = sadd.s32 %s178, 1
      %p182 = scmp.eq.s32.totalorder %s18, 1
      %p183 = scmp.ne.s32.totalorder %s178, %s180
      %p184 = scmp.eq.s32.totalorder %s18, 0
      %p185 = por %p183, %p184
      %p186 = scmp.ne.s32.totalorder %s178, %s180
      %p187 = scmp.eq.s32.totalorder %s23, 1
      %p188 = por %p186, %p187
      %p189 = scmp.ne.s32.totalorder %s180, %s181
      %p190 = scmp.eq.s32.totalorder %s23, 0
      %p191 = por %p189, %p190
      %p192 = scmp.ne.s32.totalorder %s180, %s181
      %p193 = scmp.eq.s32.totalorder %s24, 1
      %p194 = por %p192, %p193
      %p196 = scmp.ne.s32.totalorder %s181, %s195
      %p197 = scmp.eq.s32.totalorder %s24, 0
      %p198 = por %p196, %p197
      %s200 = sadd.s32 %s199, 1
      %p203 = scmp.eq.s32.totalorder %s18, 1
      %p204 = scmp.ne.s32.totalorder %s199, %s201
      %p205 = scmp.eq.s32.totalorder %s18, 0
      %p206 = por %p204, %p205
      %p207 = scmp.ne.s32.totalorder %s199, %s201
      %p208 = scmp.eq.s32.totalorder %s23, 1
      %p209 = por %p207, %p208
      %p210 = scmp.ne.s32.totalorder %s201, %s202
      %p211 = scmp.eq.s32.totalorder %s23, 0
      %p212 = por %p210, %p211
      %p213 = scmp.ne.s32.totalorder %s201, %s202
      %p214 = scmp.eq.s32.totalorder %s24, 1
      %p215 = por %p213, %p214
      %p217 = scmp.ne.s32.totalorder %s202, %s216
      %p218 = scmp.eq.s32.totalorder %s24, 0
      %p219 = por %p217, %p218
      %s220 = ssub.s32 %s18, %s25
      %p221 = scmp.eq.s32.totalorder %s220, 0
      %s223 = sadd.s32 %s222, 1
      %s224 = scalar_select %p221, %s222, %s223
      %p227 = pneg %p221
      %p228 = scmp.eq.s32.totalorder %s18, 1
      %p229 = por %p227, %p228
      %p230 = scmp.ne.s32.totalorder %s222, %s225
      %p231 = scmp.eq.s32.totalorder %s18, 0
      %p232 = por %p230, %p231
      %p233 = scmp.ne.s32.totalorder %s222, %s225
      %p234 = scmp.eq.s32.totalorder %s23, 1
      %p235 = por %p233, %p234
      %p236 = scmp.ne.s32.totalorder %s225, %s226
      %p237 = scmp.eq.s32.totalorder %s23, 0
      %p238 = por %p236, %p237
      %p239 = scmp.ne.s32.totalorder %s225, %s226
      %p240 = scmp.eq.s32.totalorder %s24, 1
      %p241 = por %p239, %p240
      %p243 = scmp.ne.s32.totalorder %s226, %s242
      %p244 = scmp.eq.s32.totalorder %s24, 0
      %p245 = por %p243, %p244
      %p246 = scmp.le.s32.totalorder 1, %s18
      %p247 = scmp.lt.s32.totalorder %s18, 3
      %p248 = pnand %p246, %p247
      %p249 = pneg %p248
      // Predicated region
      $region9: #{tpu_custom_call.1} parent=5 // pred_check
        _
      $region10: #{tpu_custom_call.1} parent=5 // pred_check_branch
        %251 = sbr.rel (%p248) target = $region12
      $region11: #{tpu_custom_call.1} parent=5 // pred_region
        %s252 = ssub.s32 %s18, 1
        // Predicated region
        $region13: #{tpu_custom_call.1} parent=11 // pred_check
          %p253 = pneg %p65
        $region14: #{tpu_custom_call.1} parent=11 // pred_check_branch
          %255 = sbr.rel (%p253) target = $region16
        $region15: #{tpu_custom_call.1} parent=11 // pred_region
          _
        $region16: #{tpu_custom_call.1} parent=11 // pred_fallthru
          _
        // Predicated region
        $region17: #{tpu_custom_call.1} parent=11 // pred_check
          %p256 = pneg %p86
        $region18: #{tpu_custom_call.1} parent=11 // pred_check_branch
          %258 = sbr.rel (%p256) target = $region20
        $region19: #{tpu_custom_call.1} parent=11 // pred_region
          _
        $region20: #{tpu_custom_call.1} parent=11 // pred_fallthru
          _
        // Predicated region
        $region21: #{tpu_custom_call.1} parent=11 // pred_check
          %p259 = pneg %p107
        $region22: #{tpu_custom_call.1} parent=11 // pred_check_branch
          %261 = sbr.rel (%p259) target = $region24
        $region23: #{tpu_custom_call.1} parent=11 // pred_region
          _
        $region24: #{tpu_custom_call.1} parent=11 // pred_fallthru
          _
        // Predicated region
        $region25: #{tpu_custom_call.1} parent=11 // pred_check
          %p262 = pneg %p128
        $region26: #{tpu_custom_call.1} parent=11 // pred_check_branch
          %264 = sbr.rel (%p262) target = $region28
        $region27: #{tpu_custom_call.1} parent=11 // pred_region
          _
        $region28: #{tpu_custom_call.1} parent=11 // pred_fallthru
          _
        // Predicated region
        $region29: #{tpu_custom_call.1} parent=11 // pred_check
          %p265 = pneg %p149
        $region30: #{tpu_custom_call.1} parent=11 // pred_check_branch
          %267 = sbr.rel (%p265) target = $region32
        $region31: #{tpu_custom_call.1} parent=11 // pred_region
          _
        $region32: #{tpu_custom_call.1} parent=11 // pred_fallthru
          _
        // Predicated region
        $region33: #{tpu_custom_call.1} parent=11 // pred_check
          %p268 = pneg %p170
        $region34: #{tpu_custom_call.1} parent=11 // pred_check_branch
          %270 = sbr.rel (%p268) target = $region36
        $region35: #{tpu_custom_call.1} parent=11 // pred_region
          _
        $region36: #{tpu_custom_call.1} parent=11 // pred_fallthru
          _
        // Predicated region
        $region37: #{tpu_custom_call.1} parent=11 // pred_check
          %p271 = pneg %p191
        $region38: #{tpu_custom_call.1} parent=11 // pred_check_branch
          %273 = sbr.rel (%p271) target = $region40
        $region39: #{tpu_custom_call.1} parent=11 // pred_region
          _
        $region40: #{tpu_custom_call.1} parent=11 // pred_fallthru
          _
        // Predicated region
        $region41: #{tpu_custom_call.1} parent=11 // pred_check
          %p274 = pneg %p212
        $region42: #{tpu_custom_call.1} parent=11 // pred_check_branch
          %276 = sbr.rel (%p274) target = $region44
        $region43: #{tpu_custom_call.1} parent=11 // pred_region
          _
        $region44: #{tpu_custom_call.1} parent=11 // pred_fallthru
          _
      $region12: #{tpu_custom_call.1} parent=5 // pred_fallthru
        _
      %p277 = scmp.lt.s32.totalorder %s18, 2
      // Predicated region
      $region45: #{tpu_custom_call.1} parent=5 // pred_check
        %p278 = pneg %p277
      $region46: #{tpu_custom_call.1} parent=5 // pred_check_branch
        %280 = sbr.rel (%p278) target = $region48
      $region47: #{tpu_custom_call.1} parent=5 // pred_region
        // Predicated region
        $region49: #{tpu_custom_call.1} parent=47 // pred_check
          %p281 = pneg %p38
        $region50: #{tpu_custom_call.1} parent=47 // pred_check_branch
          %283 = sbr.rel (%p281) target = $region52
        $region51: #{tpu_custom_call.1} parent=47 // pred_region
          %s284 = smul.u32 32, %s18
          %p285 = scmp.lt.s32.totalorder %s284, 63
          %s286 = scalar_select %p285, %s284, 63
          %s287 = smul.addr %s286, 8
          %s288 = scalar_lea.vmem %s0, %s287
          %s289 = smul.u32 32, %s18
        $region52: #{tpu_custom_call.1} parent=47 // pred_fallthru
          _
      $region48: #{tpu_custom_call.1} parent=5 // pred_fallthru
        _
      %p290 = scmp.le.s32.totalorder 1, %s18
      %p291 = scmp.lt.s32.totalorder %s18, 3
      %p292 = pnand %p290, %p291
      %p293 = pneg %p292
      // Predicated region
      $region53: #{tpu_custom_call.1} parent=5 // pred_check
        _
      $region54: #{tpu_custom_call.1} parent=5 // pred_check_branch
        %295 = sbr.rel (%p292) target = $region56
      $region55: #{tpu_custom_call.1} parent=5 // pred_region
        %s296 = ssub.s32 %s18, 1
        %s297 = smul.u32 32, %s23
        %p298 = scmp.lt.s32.totalorder %s297, 63
        %s299 = scalar_select %p298, %s297, 63
        %s300 = smul.addr %s299, 8
        %s301 = scalar_lea.vmem %s0, %s300
        %p302 = pneg %p44
        %p303 = pneg %p41
        %p304 = pneg %p65
        %p305 = pneg %p62
        %p306 = pneg %p86
        %p307 = pneg %p83
        %p308 = pneg %p107
        %p309 = pneg %p104
        %p310 = pneg %p128
        %p311 = pneg %p125
        %p312 = pneg %p149
        %p313 = pneg %p146
        %p314 = pneg %p170
        %p315 = pneg %p167
        %p316 = pneg %p191
        %p317 = pneg %p188
        %p318 = pneg %p212
        %p319 = pneg %p209
        %p320 = pneg %p238
        %p321 = pneg %p235
        %s322 = sand.u32 %s225, 1
        %s323 = scalar_lea.sflag [#allocation3], %s322
        %s324 = sand.u32 %s225, 1
        %s325 = smul.addr %s324, 256
        %s326 = scalar_lea.vmem [#allocation2], %s325
        %s327 = smul.u32 32, %s23
        %p328 = scmp.lt.s32.totalorder %s327, 63
        %s329 = scalar_select %p328, %s327, 63
        %s330 = smul.addr %s329, 8
        %s331 = scalar_lea.vmem %s0, %s330
        %s332 = smul.u32 32, %s23
        %s333 = smul.u32 32, %s23
        %v334 = vld [vmem:[%s331] sm:$0xff]
        %v335 = vld [vmem:[%s331 + $0x8] sm:$0xff]
        %v336 = vld [vmem:[%s331 + $0x10] sm:$0xff]
        %v337 = vld [vmem:[%s331 + $0x18] sm:$0xff]
        %v338 = vld [vmem:[%s331 + $0x20] sm:$0xff]
        %v339 = vld [vmem:[%s331 + $0x28] sm:$0xff]
        %v340 = vld [vmem:[%s331 + $0x30] sm:$0xff]
        %v341 = vld [vmem:[%s331 + $0x38] sm:$0xff]
        %v342 = vld [vmem:[%s331 + $0x40] sm:$0xff]
        %v343 = vld [vmem:[%s331 + $0x48] sm:$0xff]
        %v344 = vld [vmem:[%s331 + $0x50] sm:$0xff]
        %v345 = vld [vmem:[%s331 + $0x58] sm:$0xff]
        %v346 = vld [vmem:[%s331 + $0x60] sm:$0xff]
        %v347 = vld [vmem:[%s331 + $0x68] sm:$0xff]
        %v348 = vld [vmem:[%s331 + $0x70] sm:$0xff]
        %v349 = vld [vmem:[%s331 + $0x78] sm:$0xff]
        %v350 = vld [vmem:[%s331 + $0x80] sm:$0xff]
        %v351 = vld [vmem:[%s331 + $0x88] sm:$0xff]
        %v352 = vld [vmem:[%s331 + $0x90] sm:$0xff]
        %v353 = vld [vmem:[%s331 + $0x98] sm:$0xff]
        %v354 = vld [vmem:[%s331 + $0xa0] sm:$0xff]
        %v355 = vld [vmem:[%s331 + $0xa8] sm:$0xff]
        %v356 = vld [vmem:[%s331 + $0xb0] sm:$0xff]
        %v357 = vld [vmem:[%s331 + $0xb8] sm:$0xff]
        %v358 = vld [vmem:[%s331 + $0xc0] sm:$0xff]
        %v359 = vld [vmem:[%s331 + $0xc8] sm:$0xff]
        %v360 = vld [vmem:[%s331 + $0xd0] sm:$0xff]
        %v361 = vld [vmem:[%s331 + $0xd8] sm:$0xff]
        %v362 = vld [vmem:[%s331 + $0xe0] sm:$0xff]
        %v363 = vld [vmem:[%s331 + $0xe8] sm:$0xff]
        %v364 = vld [vmem:[%s331 + $0xf0] sm:$0xff]
        %v365 = vld [vmem:[%s331 + $0xf8] sm:$0xff]
        %v366 = vld [vmem:[%s2] sm:$0x1]
        %v367 = vld [vmem:[%s4] sm:$0x1]
        %v368 = vld [vmem:[%s6] sm:$0x1]
        %v369 = vld [vmem:[%s8] sm:$0x1]
        %v370 = vld [vmem:[%s1] sm:$0x1]
        %372 = vset.pattern.permute.xlu0 0
        %373 = vperm.xlu0 %372, %v334
        %v374 = vpop.permute.xlu0 %373
        %377 = vset.pattern.permute.xlu0 0
        %378 = vperm.xlu0 %377, %v335
        %v379 = vpop.permute.xlu0 %378
        %382 = vset.pattern.permute.xlu0 0
        %383 = vperm.xlu0 %382, %v336
        %v384 = vpop.permute.xlu0 %383
        %387 = vset.pattern.permute.xlu0 0
        %388 = vperm.xlu0 %387, %v337
        %v389 = vpop.permute.xlu0 %388
        %392 = vset.pattern.permute.xlu0 0
        %393 = vperm.xlu0 %392, %v338
        %v394 = vpop.permute.xlu0 %393
        %397 = vset.pattern.permute.xlu0 0
        %398 = vperm.xlu0 %397, %v339
        %v399 = vpop.permute.xlu0 %398
        %402 = vset.pattern.permute.xlu0 0
        %403 = vperm.xlu0 %402, %v340
        %v404 = vpop.permute.xlu0 %403
        %407 = vset.pattern.permute.xlu0 0
        %408 = vperm.xlu0 %407, %v341
        %v409 = vpop.permute.xlu0 %408
        %412 = vset.pattern.permute.xlu0 0
        %413 = vperm.xlu0 %412, %v342
        %v414 = vpop.permute.xlu0 %413
        %417 = vset.pattern.permute.xlu0 0
        %418 = vperm.xlu0 %417, %v343
        %v419 = vpop.permute.xlu0 %418
        %422 = vset.pattern.permute.xlu0 0
        %423 = vperm.xlu0 %422, %v344
        %v424 = vpop.permute.xlu0 %423
        %427 = vset.pattern.permute.xlu0 0
        %428 = vperm.xlu0 %427, %v345
        %v429 = vpop.permute.xlu0 %428
        %432 = vset.pattern.permute.xlu0 0
        %433 = vperm.xlu0 %432, %v346
        %v434 = vpop.permute.xlu0 %433
        %437 = vset.pattern.permute.xlu0 0
        %438 = vperm.xlu0 %437, %v347
        %v439 = vpop.permute.xlu0 %438
        %442 = vset.pattern.permute.xlu0 0
        %443 = vperm.xlu0 %442, %v348
        %v444 = vpop.permute.xlu0 %443
        %447 = vset.pattern.permute.xlu0 0
        %448 = vperm.xlu0 %447, %v349
        %v449 = vpop.permute.xlu0 %448
        %452 = vset.pattern.permute.xlu0 0
        %453 = vperm.xlu0 %452, %v350
        %v454 = vpop.permute.xlu0 %453
        %457 = vset.pattern.permute.xlu0 0
        %458 = vperm.xlu0 %457, %v351
        %v459 = vpop.permute.xlu0 %458
        %462 = vset.pattern.permute.xlu0 0
        %463 = vperm.xlu0 %462, %v352
        %v464 = vpop.permute.xlu0 %463
        %467 = vset.pattern.permute.xlu0 0
        %468 = vperm.xlu0 %467, %v353
        %v469 = vpop.permute.xlu0 %468
        %472 = vset.pattern.permute.xlu0 0
        %473 = vperm.xlu0 %472, %v354
        %v474 = vpop.permute.xlu0 %473
        %477 = vset.pattern.permute.xlu0 0
        %478 = vperm.xlu0 %477, %v355
        %v479 = vpop.permute.xlu0 %478
        %482 = vset.pattern.permute.xlu0 0
        %483 = vperm.xlu0 %482, %v356
        %v484 = vpop.permute.xlu0 %483
        %487 = vset.pattern.permute.xlu0 0
        %488 = vperm.xlu0 %487, %v357
        %v489 = vpop.permute.xlu0 %488
        %492 = vset.pattern.permute.xlu0 0
        %493 = vperm.xlu0 %492, %v358
        %v494 = vpop.permute.xlu0 %493
        %497 = vset.pattern.permute.xlu0 0
        %498 = vperm.xlu0 %497, %v359
        %v499 = vpop.permute.xlu0 %498
        %502 = vset.pattern.permute.xlu0 0
        %503 = vperm.xlu0 %502, %v360
        %v504 = vpop.permute.xlu0 %503
        %507 = vset.pattern.permute.xlu0 0
        %508 = vperm.xlu0 %507, %v361
        %v509 = vpop.permute.xlu0 %508
        %512 = vset.pattern.permute.xlu0 0
        %513 = vperm.xlu0 %512, %v362
        %v514 = vpop.permute.xlu0 %513
        %517 = vset.pattern.permute.xlu0 0
        %518 = vperm.xlu0 %517, %v363
        %v519 = vpop.permute.xlu0 %518
        %522 = vset.pattern.permute.xlu0 0
        %523 = vperm.xlu0 %522, %v364
        %v524 = vpop.permute.xlu0 %523
        %527 = vset.pattern.permute.xlu0 0
        %528 = vperm.xlu0 %527, %v365
        %v529 = vpop.permute.xlu0 %528
        %v532 = vperm.slane %v370, 0
        %v534 = vmul.f32 %v374, %v532
        %v535 = vmul.f32 %v379, %v532
        %v536 = vmul.f32 %v384, %v532
        %v537 = vmul.f32 %v389, %v532
        %v538 = vmul.f32 %v394, %v532
        %v539 = vmul.f32 %v399, %v532
        %v540 = vmul.f32 %v404, %v532
        %v541 = vmul.f32 %v409, %v532
        %v542 = vmul.f32 %v414, %v532
        %v543 = vmul.f32 %v419, %v532
        %v544 = vmul.f32 %v424, %v532
        %v545 = vmul.f32 %v429, %v532
        %v546 = vmul.f32 %v434, %v532
        %v547 = vmul.f32 %v439, %v532
        %v548 = vmul.f32 %v444, %v532
        %v549 = vmul.f32 %v449, %v532
        %v550 = vmul.f32 %v454, %v532
        %v551 = vmul.f32 %v459, %v532
        %v552 = vmul.f32 %v464, %v532
        %v553 = vmul.f32 %v469, %v532
        %v554 = vmul.f32 %v474, %v532
        %v555 = vmul.f32 %v479, %v532
        %v556 = vmul.f32 %v484, %v532
        %v557 = vmul.f32 %v489, %v532
        %v558 = vmul.f32 %v494, %v532
        %v559 = vmul.f32 %v499, %v532
        %v560 = vmul.f32 %v504, %v532
        %v561 = vmul.f32 %v509, %v532
        %v562 = vmul.f32 %v514, %v532
        %v563 = vmul.f32 %v519, %v532
        %v564 = vmul.f32 %v524, %v532
        %v565 = vmul.f32 %v529, %v532
        %v567 = vperm.slane %v366, 0
        %v569 = vadd.f32 %v534, %v567
        %v570 = vadd.f32 %v535, %v567
        %v571 = vadd.f32 %v536, %v567
        %v572 = vadd.f32 %v537, %v567
        %v573 = vadd.f32 %v538, %v567
        %v574 = vadd.f32 %v539, %v567
        %v575 = vadd.f32 %v540, %v567
        %v576 = vadd.f32 %v541, %v567
        %v577 = vadd.f32 %v542, %v567
        %v578 = vadd.f32 %v543, %v567
        %v579 = vadd.f32 %v544, %v567
        %v580 = vadd.f32 %v545, %v567
        %v581 = vadd.f32 %v546, %v567
        %v582 = vadd.f32 %v547, %v567
        %v583 = vadd.f32 %v548, %v567
        %v584 = vadd.f32 %v549, %v567
        %v585 = vadd.f32 %v550, %v567
        %v586 = vadd.f32 %v551, %v567
        %v587 = vadd.f32 %v552, %v567
        %v588 = vadd.f32 %v553, %v567
        %v589 = vadd.f32 %v554, %v567
        %v590 = vadd.f32 %v555, %v567
        %v591 = vadd.f32 %v556, %v567
        %v592 = vadd.f32 %v557, %v567
        %v593 = vadd.f32 %v558, %v567
        %v594 = vadd.f32 %v559, %v567
        %v595 = vadd.f32 %v560, %v567
        %v596 = vadd.f32 %v561, %v567
        %v597 = vadd.f32 %v562, %v567
        %v598 = vadd.f32 %v563, %v567
        %v599 = vadd.f32 %v564, %v567
        %v600 = vadd.f32 %v565, %v567
        %v601 = vmax.f32 %v569, 0.0
        %v602 = vmax.f32 %v570, 0.0
        %v603 = vmax.f32 %v571, 0.0
        %v604 = vmax.f32 %v572, 0.0
        %v605 = vmax.f32 %v573, 0.0
        %v606 = vmax.f32 %v574, 0.0
        %v607 = vmax.f32 %v575, 0.0
        %v608 = vmax.f32 %v576, 0.0
        %v609 = vmax.f32 %v577, 0.0
        %v610 = vmax.f32 %v578, 0.0
        %v611 = vmax.f32 %v579, 0.0
        %v612 = vmax.f32 %v580, 0.0
        %v613 = vmax.f32 %v581, 0.0
        %v614 = vmax.f32 %v582, 0.0
        %v615 = vmax.f32 %v583, 0.0
        %v616 = vmax.f32 %v584, 0.0
        %v617 = vmax.f32 %v585, 0.0
        %v618 = vmax.f32 %v586, 0.0
        %v619 = vmax.f32 %v587, 0.0
        %v620 = vmax.f32 %v588, 0.0
        %v621 = vmax.f32 %v589, 0.0
        %v622 = vmax.f32 %v590, 0.0
        %v623 = vmax.f32 %v591, 0.0
        %v624 = vmax.f32 %v592, 0.0
        %v625 = vmax.f32 %v593, 0.0
        %v626 = vmax.f32 %v594, 0.0
        %v627 = vmax.f32 %v595, 0.0
        %v628 = vmax.f32 %v596, 0.0
        %v629 = vmax.f32 %v597, 0.0
        %v630 = vmax.f32 %v598, 0.0
        %v631 = vmax.f32 %v599, 0.0
        %v632 = vmax.f32 %v600, 0.0
        %v633 = vld [vmem:[%s3] sm:$0xff]
        %v634 = vld [vmem:[%s3 + $0x8] sm:$0xff]
        %v635 = vld [vmem:[%s3 + $0x10] sm:$0xff]
        %v636 = vld [vmem:[%s3 + $0x18] sm:$0xff]
        %v637 = vld [vmem:[%s3 + $0x20] sm:$0xff]
        %v638 = vld [vmem:[%s3 + $0x28] sm:$0xff]
        %v639 = vld [vmem:[%s3 + $0x30] sm:$0xff]
        %v640 = vld [vmem:[%s3 + $0x38] sm:$0xff]
        %v641 = vld [vmem:[%s3 + $0x40] sm:$0xff]
        %v642 = vld [vmem:[%s3 + $0x48] sm:$0xff]
        %v643 = vld [vmem:[%s3 + $0x50] sm:$0xff]
        %v644 = vld [vmem:[%s3 + $0x58] sm:$0xff]
        %v645 = vld [vmem:[%s3 + $0x60] sm:$0xff]
        %v646 = vld [vmem:[%s3 + $0x68] sm:$0xff]
        %v647 = vld [vmem:[%s3 + $0x70] sm:$0xff]
        %v648 = vld [vmem:[%s3 + $0x78] sm:$0xff]
        %v650 = vperm.slane %v367, 0
        %652 = vmatpush.msra.mxu0 %v648
        %653 = vmatpush.msra.mxu0 %v647
        %654 = vmatpush.msra.mxu0 %v646
        %655 = vmatpush.msra.mxu0 %v645
        %656 = vmatpush.msra.mxu0 %v644
        %657 = vmatpush.msra.mxu0 %v643
        %658 = vmatpush.msra.mxu0 %v642
        %659 = vmatpush.msra.mxu0 %v641
        %660 = vmatpush.msra.mxu0 %v640
        %661 = vmatpush.msra.mxu0 %v639
        %662 = vmatpush.msra.mxu0 %v638
        %663 = vmatpush.msra.mxu0 %v637
        %664 = vmatpush.msra.mxu0 %v636
        %665 = vmatpush.msra.mxu0 %v635
        %666 = vmatpush.msra.mxu0 %v634
        %667 = vmatpush.msra.mxu0 %v633
        %668 = vmatmul.f32.gmra.mxu0 %v601
        %v669 = vpop.f32.mrf.mxu0
        %v670 = vadd.f32 %v650, %v669
        %671 = vmatmul.f32.gmra.mxu0 %v602
        %v672 = vpop.f32.mrf.mxu0
        %v673 = vadd.f32 %v650, %v672
        %674 = vmatmul.f32.gmra.mxu0 %v603
        %v675 = vpop.f32.mrf.mxu0
        %v676 = vadd.f32 %v650, %v675
        %677 = vmatmul.f32.gmra.mxu0 %v604
        %v678 = vpop.f32.mrf.mxu0
        %v679 = vadd.f32 %v650, %v678
        %680 = vmatmul.f32.gmra.mxu0 %v605
        %v681 = vpop.f32.mrf.mxu0
        %v682 = vadd.f32 %v650, %v681
        %683 = vmatmul.f32.gmra.mxu0 %v606
        %v684 = vpop.f32.mrf.mxu0
        %v685 = vadd.f32 %v650, %v684
        %686 = vmatmul.f32.gmra.mxu0 %v607
        %v687 = vpop.f32.mrf.mxu0
        %v688 = vadd.f32 %v650, %v687
        %689 = vmatmul.f32.gmra.mxu0 %v608
        %v690 = vpop.f32.mrf.mxu0
        %v691 = vadd.f32 %v650, %v690
        %692 = vmatmul.f32.gmra.mxu0 %v609
        %v693 = vpop.f32.mrf.mxu0
        %v694 = vadd.f32 %v650, %v693
        %695 = vmatmul.f32.gmra.mxu0 %v610
        %v696 = vpop.f32.mrf.mxu0
        %v697 = vadd.f32 %v650, %v696
        %698 = vmatmul.f32.gmra.mxu0 %v611
        %v699 = vpop.f32.mrf.mxu0
        %v700 = vadd.f32 %v650, %v699
        %701 = vmatmul.f32.gmra.mxu0 %v612
        %v702 = vpop.f32.mrf.mxu0
        %v703 = vadd.f32 %v650, %v702
        %704 = vmatmul.f32.gmra.mxu0 %v613
        %v705 = vpop.f32.mrf.mxu0
        %v706 = vadd.f32 %v650, %v705
        %707 = vmatmul.f32.gmra.mxu0 %v614
        %v708 = vpop.f32.mrf.mxu0
        %v709 = vadd.f32 %v650, %v708
        %710 = vmatmul.f32.gmra.mxu0 %v615
        %v711 = vpop.f32.mrf.mxu0
        %v712 = vadd.f32 %v650, %v711
        %713 = vmatmul.f32.gmra.mxu0 %v616
        %v714 = vpop.f32.mrf.mxu0
        %v715 = vadd.f32 %v650, %v714
        %716 = vmatmul.f32.gmra.mxu0 %v617
        %v717 = vpop.f32.mrf.mxu0
        %v718 = vadd.f32 %v650, %v717
        %719 = vmatmul.f32.gmra.mxu0 %v618
        %v720 = vpop.f32.mrf.mxu0
        %v721 = vadd.f32 %v650, %v720
        %722 = vmatmul.f32.gmra.mxu0 %v619
        %v723 = vpop.f32.mrf.mxu0
        %v724 = vadd.f32 %v650, %v723
        %725 = vmatmul.f32.gmra.mxu0 %v620
        %v726 = vpop.f32.mrf.mxu0
        %v727 = vadd.f32 %v650, %v726
        %728 = vmatmul.f32.gmra.mxu0 %v621
        %v729 = vpop.f32.mrf.mxu0
        %v730 = vadd.f32 %v650, %v729
        %731 = vmatmul.f32.gmra.mxu0 %v622
        %v732 = vpop.f32.mrf.mxu0
        %v733 = vadd.f32 %v650, %v732
        %734 = vmatmul.f32.gmra.mxu0 %v623
        %v735 = vpop.f32.mrf.mxu0
        %v736 = vadd.f32 %v650, %v735
        %737 = vmatmul.f32.gmra.mxu0 %v624
        %v738 = vpop.f32.mrf.mxu0
        %v739 = vadd.f32 %v650, %v738
        %740 = vmatmul.f32.gmra.mxu0 %v625
        %v741 = vpop.f32.mrf.mxu0
        %v742 = vadd.f32 %v650, %v741
        %743 = vmatmul.f32.gmra.mxu0 %v626
        %v744 = vpop.f32.mrf.mxu0
        %v745 = vadd.f32 %v650, %v744
        %746 = vmatmul.f32.gmra.mxu0 %v627
        %v747 = vpop.f32.mrf.mxu0
        %v748 = vadd.f32 %v650, %v747
        %749 = vmatmul.f32.gmra.mxu0 %v628
        %v750 = vpop.f32.mrf.mxu0
        %v751 = vadd.f32 %v650, %v750
        %752 = vmatmul.f32.gmra.mxu0 %v629
        %v753 = vpop.f32.mrf.mxu0
        %v754 = vadd.f32 %v650, %v753
        %755 = vmatmul.f32.gmra.mxu0 %v630
        %v756 = vpop.f32.mrf.mxu0
        %v757 = vadd.f32 %v650, %v756
        %758 = vmatmul.f32.gmra.mxu0 %v631
        %v759 = vpop.f32.mrf.mxu0
        %v760 = vadd.f32 %v650, %v759
        %761 = vmatmul.f32.gmra.mxu0 %v632
        %v762 = vpop.f32.mrf.mxu0
        %v763 = vadd.f32 %v650, %v762
        %764 = vdwg.mxu0
        %v765 = vmax.f32 %v670, 0.0
        %v766 = vmax.f32 %v673, 0.0
        %v767 = vmax.f32 %v676, 0.0
        %v768 = vmax.f32 %v679, 0.0
        %v769 = vmax.f32 %v682, 0.0
        %v770 = vmax.f32 %v685, 0.0
        %v771 = vmax.f32 %v688, 0.0
        %v772 = vmax.f32 %v691, 0.0
        %v773 = vmax.f32 %v694, 0.0
        %v774 = vmax.f32 %v697, 0.0
        %v775 = vmax.f32 %v700, 0.0
        %v776 = vmax.f32 %v703, 0.0
        %v777 = vmax.f32 %v706, 0.0
        %v778 = vmax.f32 %v709, 0.0
        %v779 = vmax.f32 %v712, 0.0
        %v780 = vmax.f32 %v715, 0.0
        %v781 = vmax.f32 %v718, 0.0
        %v782 = vmax.f32 %v721, 0.0
        %v783 = vmax.f32 %v724, 0.0
        %v784 = vmax.f32 %v727, 0.0
        %v785 = vmax.f32 %v730, 0.0
        %v786 = vmax.f32 %v733, 0.0
        %v787 = vmax.f32 %v736, 0.0
        %v788 = vmax.f32 %v739, 0.0
        %v789 = vmax.f32 %v742, 0.0
        %v790 = vmax.f32 %v745, 0.0
        %v791 = vmax.f32 %v748, 0.0
        %v792 = vmax.f32 %v751, 0.0
        %v793 = vmax.f32 %v754, 0.0
        %v794 = vmax.f32 %v757, 0.0
        %v795 = vmax.f32 %v760, 0.0
        %v796 = vmax.f32 %v763, 0.0
        %v797 = vld [vmem:[%s5] sm:$0xff]
        %v798 = vld [vmem:[%s5 + $0x8] sm:$0xff]
        %v799 = vld [vmem:[%s5 + $0x10] sm:$0xff]
        %v800 = vld [vmem:[%s5 + $0x18] sm:$0xff]
        %v801 = vld [vmem:[%s5 + $0x20] sm:$0xff]
        %v802 = vld [vmem:[%s5 + $0x28] sm:$0xff]
        %v803 = vld [vmem:[%s5 + $0x30] sm:$0xff]
        %v804 = vld [vmem:[%s5 + $0x38] sm:$0xff]
        %v805 = vld [vmem:[%s5 + $0x40] sm:$0xff]
        %v806 = vld [vmem:[%s5 + $0x48] sm:$0xff]
        %v807 = vld [vmem:[%s5 + $0x50] sm:$0xff]
        %v808 = vld [vmem:[%s5 + $0x58] sm:$0xff]
        %v809 = vld [vmem:[%s5 + $0x60] sm:$0xff]
        %v810 = vld [vmem:[%s5 + $0x68] sm:$0xff]
        %v811 = vld [vmem:[%s5 + $0x70] sm:$0xff]
        %v812 = vld [vmem:[%s5 + $0x78] sm:$0xff]
        %v814 = vperm.slane %v368, 0
        %816 = vmatpush.msra.mxu0 %v812
        %817 = vmatpush.msra.mxu0 %v811
        %818 = vmatpush.msra.mxu0 %v810
        %819 = vmatpush.msra.mxu0 %v809
        %820 = vmatpush.msra.mxu0 %v808
        %821 = vmatpush.msra.mxu0 %v807
        %822 = vmatpush.msra.mxu0 %v806
        %823 = vmatpush.msra.mxu0 %v805
        %824 = vmatpush.msra.mxu0 %v804
        %825 = vmatpush.msra.mxu0 %v803
        %826 = vmatpush.msra.mxu0 %v802
        %827 = vmatpush.msra.mxu0 %v801
        %828 = vmatpush.msra.mxu0 %v800
        %829 = vmatpush.msra.mxu0 %v799
        %830 = vmatpush.msra.mxu0 %v798
        %831 = vmatpush.msra.mxu0 %v797
        %832 = vmatmul.f32.gmra.mxu0 %v765
        %v833 = vpop.f32.mrf.mxu0
        %v834 = vadd.f32 %v814, %v833
        %835 = vmatmul.f32.gmra.mxu0 %v766
        %v836 = vpop.f32.mrf.mxu0
        %v837 = vadd.f32 %v814, %v836
        %838 = vmatmul.f32.gmra.mxu0 %v767
        %v839 = vpop.f32.mrf.mxu0
        %v840 = vadd.f32 %v814, %v839
        %841 = vmatmul.f32.gmra.mxu0 %v768
        %v842 = vpop.f32.mrf.mxu0
        %v843 = vadd.f32 %v814, %v842
        %844 = vmatmul.f32.gmra.mxu0 %v769
        %v845 = vpop.f32.mrf.mxu0
        %v846 = vadd.f32 %v814, %v845
        %847 = vmatmul.f32.gmra.mxu0 %v770
        %v848 = vpop.f32.mrf.mxu0
        %v849 = vadd.f32 %v814, %v848
        %850 = vmatmul.f32.gmra.mxu0 %v771
        %v851 = vpop.f32.mrf.mxu0
        %v852 = vadd.f32 %v814, %v851
        %853 = vmatmul.f32.gmra.mxu0 %v772
        %v854 = vpop.f32.mrf.mxu0
        %v855 = vadd.f32 %v814, %v854
        %856 = vmatmul.f32.gmra.mxu0 %v773
        %v857 = vpop.f32.mrf.mxu0
        %v858 = vadd.f32 %v814, %v857
        %859 = vmatmul.f32.gmra.mxu0 %v774
        %v860 = vpop.f32.mrf.mxu0
        %v861 = vadd.f32 %v814, %v860
        %862 = vmatmul.f32.gmra.mxu0 %v775
        %v863 = vpop.f32.mrf.mxu0
        %v864 = vadd.f32 %v814, %v863
        %865 = vmatmul.f32.gmra.mxu0 %v776
        %v866 = vpop.f32.mrf.mxu0
        %v867 = vadd.f32 %v814, %v866
        %868 = vmatmul.f32.gmra.mxu0 %v777
        %v869 = vpop.f32.mrf.mxu0
        %v870 = vadd.f32 %v814, %v869
        %871 = vmatmul.f32.gmra.mxu0 %v778
        %v872 = vpop.f32.mrf.mxu0
        %v873 = vadd.f32 %v814, %v872
        %874 = vmatmul.f32.gmra.mxu0 %v779
        %v875 = vpop.f32.mrf.mxu0
        %v876 = vadd.f32 %v814, %v875
        %877 = vmatmul.f32.gmra.mxu0 %v780
        %v878 = vpop.f32.mrf.mxu0
        %v879 = vadd.f32 %v814, %v878
        %880 = vmatmul.f32.gmra.mxu0 %v781
        %v881 = vpop.f32.mrf.mxu0
        %v882 = vadd.f32 %v814, %v881
        %883 = vmatmul.f32.gmra.mxu0 %v782
        %v884 = vpop.f32.mrf.mxu0
        %v885 = vadd.f32 %v814, %v884
        %886 = vmatmul.f32.gmra.mxu0 %v783
        %v887 = vpop.f32.mrf.mxu0
        %v888 = vadd.f32 %v814, %v887
        %889 = vmatmul.f32.gmra.mxu0 %v784
        %v890 = vpop.f32.mrf.mxu0
        %v891 = vadd.f32 %v814, %v890
        %892 = vmatmul.f32.gmra.mxu0 %v785
        %v893 = vpop.f32.mrf.mxu0
        %v894 = vadd.f32 %v814, %v893
        %895 = vmatmul.f32.gmra.mxu0 %v786
        %v896 = vpop.f32.mrf.mxu0
        %v897 = vadd.f32 %v814, %v896
        %898 = vmatmul.f32.gmra.mxu0 %v787
        %v899 = vpop.f32.mrf.mxu0
        %v900 = vadd.f32 %v814, %v899
        %901 = vmatmul.f32.gmra.mxu0 %v788
        %v902 = vpop.f32.mrf.mxu0
        %v903 = vadd.f32 %v814, %v902
        %904 = vmatmul.f32.gmra.mxu0 %v789
        %v905 = vpop.f32.mrf.mxu0
        %v906 = vadd.f32 %v814, %v905
        %907 = vmatmul.f32.gmra.mxu0 %v790
        %v908 = vpop.f32.mrf.mxu0
        %v909 = vadd.f32 %v814, %v908
        %910 = vmatmul.f32.gmra.mxu0 %v791
        %v911 = vpop.f32.mrf.mxu0
        %v912 = vadd.f32 %v814, %v911
        %913 = vmatmul.f32.gmra.mxu0 %v792
        %v914 = vpop.f32.mrf.mxu0
        %v915 = vadd.f32 %v814, %v914
        %916 = vmatmul.f32.gmra.mxu0 %v793
        %v917 = vpop.f32.mrf.mxu0
        %v918 = vadd.f32 %v814, %v917
        %919 = vmatmul.f32.gmra.mxu0 %v794
        %v920 = vpop.f32.mrf.mxu0
        %v921 = vadd.f32 %v814, %v920
        %922 = vmatmul.f32.gmra.mxu0 %v795
        %v923 = vpop.f32.mrf.mxu0
        %v924 = vadd.f32 %v814, %v923
        %925 = vmatmul.f32.gmra.mxu0 %v796
        %v926 = vpop.f32.mrf.mxu0
        %v927 = vadd.f32 %v814, %v926
        %928 = vdwg.mxu0
        %v929 = vmax.f32 %v834, 0.0
        %v930 = vmax.f32 %v837, 0.0
        %v931 = vmax.f32 %v840, 0.0
        %v932 = vmax.f32 %v843, 0.0
        %v933 = vmax.f32 %v846, 0.0
        %v934 = vmax.f32 %v849, 0.0
        %v935 = vmax.f32 %v852, 0.0
        %v936 = vmax.f32 %v855, 0.0
        %v937 = vmax.f32 %v858, 0.0
        %v938 = vmax.f32 %v861, 0.0
        %v939 = vmax.f32 %v864, 0.0
        %v940 = vmax.f32 %v867, 0.0
        %v941 = vmax.f32 %v870, 0.0
        %v942 = vmax.f32 %v873, 0.0
        %v943 = vmax.f32 %v876, 0.0
        %v944 = vmax.f32 %v879, 0.0
        %v945 = vmax.f32 %v882, 0.0
        %v946 = vmax.f32 %v885, 0.0
        %v947 = vmax.f32 %v888, 0.0
        %v948 = vmax.f32 %v891, 0.0
        %v949 = vmax.f32 %v894, 0.0
        %v950 = vmax.f32 %v897, 0.0
        %v951 = vmax.f32 %v900, 0.0
        %v952 = vmax.f32 %v903, 0.0
        %v953 = vmax.f32 %v906, 0.0
        %v954 = vmax.f32 %v909, 0.0
        %v955 = vmax.f32 %v912, 0.0
        %v956 = vmax.f32 %v915, 0.0
        %v957 = vmax.f32 %v918, 0.0
        %v958 = vmax.f32 %v921, 0.0
        %v959 = vmax.f32 %v924, 0.0
        %v960 = vmax.f32 %v927, 0.0
        %v961 = vld [vmem:[%s7] sm:$0xff]
        %v962 = vld [vmem:[%s7 + $0x8] sm:$0xff]
        %v963 = vld [vmem:[%s7 + $0x10] sm:$0xff]
        %v964 = vld [vmem:[%s7 + $0x18] sm:$0xff]
        %v965 = vld [vmem:[%s7 + $0x20] sm:$0xff]
        %v966 = vld [vmem:[%s7 + $0x28] sm:$0xff]
        %v967 = vld [vmem:[%s7 + $0x30] sm:$0xff]
        %v968 = vld [vmem:[%s7 + $0x38] sm:$0xff]
        %v969 = vld [vmem:[%s7 + $0x40] sm:$0xff]
        %v970 = vld [vmem:[%s7 + $0x48] sm:$0xff]
        %v971 = vld [vmem:[%s7 + $0x50] sm:$0xff]
        %v972 = vld [vmem:[%s7 + $0x58] sm:$0xff]
        %v973 = vld [vmem:[%s7 + $0x60] sm:$0xff]
        %v974 = vld [vmem:[%s7 + $0x68] sm:$0xff]
        %v975 = vld [vmem:[%s7 + $0x70] sm:$0xff]
        %v976 = vld [vmem:[%s7 + $0x78] sm:$0xff]
        %v978 = vperm.slane %v369, 0
        %980 = vmatpush.msra.mxu0 %v976
        %981 = vmatpush.msra.mxu0 %v975
        %982 = vmatpush.msra.mxu0 %v974
        %983 = vmatpush.msra.mxu0 %v973
        %984 = vmatpush.msra.mxu0 %v972
        %985 = vmatpush.msra.mxu0 %v971
        %986 = vmatpush.msra.mxu0 %v970
        %987 = vmatpush.msra.mxu0 %v969
        %988 = vmatpush.msra.mxu0 %v968
        %989 = vmatpush.msra.mxu0 %v967
        %990 = vmatpush.msra.mxu0 %v966
        %991 = vmatpush.msra.mxu0 %v965
        %992 = vmatpush.msra.mxu0 %v964
        %993 = vmatpush.msra.mxu0 %v963
        %994 = vmatpush.msra.mxu0 %v962
        %995 = vmatpush.msra.mxu0 %v961
        %996 = vmatmul.f32.gmra.mxu0 %v929
        %v997 = vpop.f32.mrf.mxu0
        %v998 = vadd.f32 %v978, %v997
        %999 = vmatmul.f32.gmra.mxu0 %v930
        %v1000 = vpop.f32.mrf.mxu0
        %v1001 = vadd.f32 %v978, %v1000
        %1002 = vmatmul.f32.gmra.mxu0 %v931
        %v1003 = vpop.f32.mrf.mxu0
        %v1004 = vadd.f32 %v978, %v1003
        %1005 = vmatmul.f32.gmra.mxu0 %v932
        %v1006 = vpop.f32.mrf.mxu0
        %v1007 = vadd.f32 %v978, %v1006
        %1008 = vmatmul.f32.gmra.mxu0 %v933
        %v1009 = vpop.f32.mrf.mxu0
        %v1010 = vadd.f32 %v978, %v1009
        %1011 = vmatmul.f32.gmra.mxu0 %v934
        %v1012 = vpop.f32.mrf.mxu0
        %v1013 = vadd.f32 %v978, %v1012
        %1014 = vmatmul.f32.gmra.mxu0 %v935
        %v1015 = vpop.f32.mrf.mxu0
        %v1016 = vadd.f32 %v978, %v1015
        %1017 = vmatmul.f32.gmra.mxu0 %v936
        %v1018 = vpop.f32.mrf.mxu0
        %v1019 = vadd.f32 %v978, %v1018
        %1020 = vmatmul.f32.gmra.mxu0 %v937
        %v1021 = vpop.f32.mrf.mxu0
        %v1022 = vadd.f32 %v978, %v1021
        %1023 = vmatmul.f32.gmra.mxu0 %v938
        %v1024 = vpop.f32.mrf.mxu0
        %v1025 = vadd.f32 %v978, %v1024
        %1026 = vmatmul.f32.gmra.mxu0 %v939
        %v1027 = vpop.f32.mrf.mxu0
        %v1028 = vadd.f32 %v978, %v1027
        %1029 = vmatmul.f32.gmra.mxu0 %v940
        %v1030 = vpop.f32.mrf.mxu0
        %v1031 = vadd.f32 %v978, %v1030
        %1032 = vmatmul.f32.gmra.mxu0 %v941
        %v1033 = vpop.f32.mrf.mxu0
        %v1034 = vadd.f32 %v978, %v1033
        %1035 = vmatmul.f32.gmra.mxu0 %v942
        %v1036 = vpop.f32.mrf.mxu0
        %v1037 = vadd.f32 %v978, %v1036
        %1038 = vmatmul.f32.gmra.mxu0 %v943
        %v1039 = vpop.f32.mrf.mxu0
        %v1040 = vadd.f32 %v978, %v1039
        %1041 = vmatmul.f32.gmra.mxu0 %v944
        %v1042 = vpop.f32.mrf.mxu0
        %v1043 = vadd.f32 %v978, %v1042
        %1044 = vmatmul.f32.gmra.mxu0 %v945
        %v1045 = vpop.f32.mrf.mxu0
        %v1046 = vadd.f32 %v978, %v1045
        %1047 = vmatmul.f32.gmra.mxu0 %v946
        %v1048 = vpop.f32.mrf.mxu0
        %v1049 = vadd.f32 %v978, %v1048
        %1050 = vmatmul.f32.gmra.mxu0 %v947
        %v1051 = vpop.f32.mrf.mxu0
        %v1052 = vadd.f32 %v978, %v1051
        %1053 = vmatmul.f32.gmra.mxu0 %v948
        %v1054 = vpop.f32.mrf.mxu0
        %v1055 = vadd.f32 %v978, %v1054
        %1056 = vmatmul.f32.gmra.mxu0 %v949
        %v1057 = vpop.f32.mrf.mxu0
        %v1058 = vadd.f32 %v978, %v1057
        %1059 = vmatmul.f32.gmra.mxu0 %v950
        %v1060 = vpop.f32.mrf.mxu0
        %v1061 = vadd.f32 %v978, %v1060
        %1062 = vmatmul.f32.gmra.mxu0 %v951
        %v1063 = vpop.f32.mrf.mxu0
        %v1064 = vadd.f32 %v978, %v1063
        %1065 = vmatmul.f32.gmra.mxu0 %v952
        %v1066 = vpop.f32.mrf.mxu0
        %v1067 = vadd.f32 %v978, %v1066
        %1068 = vmatmul.f32.gmra.mxu0 %v953
        %v1069 = vpop.f32.mrf.mxu0
        %v1070 = vadd.f32 %v978, %v1069
        %1071 = vmatmul.f32.gmra.mxu0 %v954
        %v1072 = vpop.f32.mrf.mxu0
        %v1073 = vadd.f32 %v978, %v1072
        %1074 = vmatmul.f32.gmra.mxu0 %v955
        %v1075 = vpop.f32.mrf.mxu0
        %v1076 = vadd.f32 %v978, %v1075
        %1077 = vmatmul.f32.gmra.mxu0 %v956
        %v1078 = vpop.f32.mrf.mxu0
        %v1079 = vadd.f32 %v978, %v1078
        %1080 = vmatmul.f32.gmra.mxu0 %v957
        %v1081 = vpop.f32.mrf.mxu0
        %v1082 = vadd.f32 %v978, %v1081
        %1083 = vmatmul.f32.gmra.mxu0 %v958
        %v1084 = vpop.f32.mrf.mxu0
        %v1085 = vadd.f32 %v978, %v1084
        %1086 = vmatmul.f32.gmra.mxu0 %v959
        %v1087 = vpop.f32.mrf.mxu0
        %v1088 = vadd.f32 %v978, %v1087
        %1089 = vmatmul.f32.gmra.mxu0 %v960
        %v1090 = vpop.f32.mrf.mxu0
        %v1091 = vadd.f32 %v978, %v1090
        %1092 = vdwg.mxu0
        %1093 = vmax.xlane.f32.xlu0 %v998
        %v1094 = vpop.xlane.xlu0 %1093
        %1095 = vmax.xlane.f32.xlu0 %v1001
        %v1096 = vpop.xlane.xlu0 %1095
        %1097 = vmax.xlane.f32.xlu0 %v1004
        %v1098 = vpop.xlane.xlu0 %1097
        %1099 = vmax.xlane.f32.xlu0 %v1007
        %v1100 = vpop.xlane.xlu0 %1099
        %1101 = vmax.xlane.f32.xlu0 %v1010
        %v1102 = vpop.xlane.xlu0 %1101
        %1103 = vmax.xlane.f32.xlu0 %v1013
        %v1104 = vpop.xlane.xlu0 %1103
        %1105 = vmax.xlane.f32.xlu0 %v1016
        %v1106 = vpop.xlane.xlu0 %1105
        %1107 = vmax.xlane.f32.xlu0 %v1019
        %v1108 = vpop.xlane.xlu0 %1107
        %1109 = vmax.xlane.f32.xlu0 %v1022
        %v1110 = vpop.xlane.xlu0 %1109
        %1111 = vmax.xlane.f32.xlu0 %v1025
        %v1112 = vpop.xlane.xlu0 %1111
        %1113 = vmax.xlane.f32.xlu0 %v1028
        %v1114 = vpop.xlane.xlu0 %1113
        %1115 = vmax.xlane.f32.xlu0 %v1031
        %v1116 = vpop.xlane.xlu0 %1115
        %1117 = vmax.xlane.f32.xlu0 %v1034
        %v1118 = vpop.xlane.xlu0 %1117
        %1119 = vmax.xlane.f32.xlu0 %v1037
        %v1120 = vpop.xlane.xlu0 %1119
        %1121 = vmax.xlane.f32.xlu0 %v1040
        %v1122 = vpop.xlane.xlu0 %1121
        %1123 = vmax.xlane.f32.xlu0 %v1043
        %v1124 = vpop.xlane.xlu0 %1123
        %1125 = vmax.xlane.f32.xlu0 %v1046
        %v1126 = vpop.xlane.xlu0 %1125
        %1127 = vmax.xlane.f32.xlu0 %v1049
        %v1128 = vpop.xlane.xlu0 %1127
        %1129 = vmax.xlane.f32.xlu0 %v1052
        %v1130 = vpop.xlane.xlu0 %1129
        %1131 = vmax.xlane.f32.xlu0 %v1055
        %v1132 = vpop.xlane.xlu0 %1131
        %1133 = vmax.xlane.f32.xlu0 %v1058
        %v1134 = vpop.xlane.xlu0 %1133
        %1135 = vmax.xlane.f32.xlu0 %v1061
        %v1136 = vpop.xlane.xlu0 %1135
        %1137 = vmax.xlane.f32.xlu0 %v1064
        %v1138 = vpop.xlane.xlu0 %1137
        %1139 = vmax.xlane.f32.xlu0 %v1067
        %v1140 = vpop.xlane.xlu0 %1139
        %1141 = vmax.xlane.f32.xlu0 %v1070
        %v1142 = vpop.xlane.xlu0 %1141
        %1143 = vmax.xlane.f32.xlu0 %v1073
        %v1144 = vpop.xlane.xlu0 %1143
        %1145 = vmax.xlane.f32.xlu0 %v1076
        %v1146 = vpop.xlane.xlu0 %1145
        %1147 = vmax.xlane.f32.xlu0 %v1079
        %v1148 = vpop.xlane.xlu0 %1147
        %1149 = vmax.xlane.f32.xlu0 %v1082
        %v1150 = vpop.xlane.xlu0 %1149
        %1151 = vmax.xlane.f32.xlu0 %v1085
        %v1152 = vpop.xlane.xlu0 %1151
        %1153 = vmax.xlane.f32.xlu0 %v1088
        %v1154 = vpop.xlane.xlu0 %1153
        %1155 = vmax.xlane.f32.xlu0 %v1091
        %v1156 = vpop.xlane.xlu0 %1155
        %v1157 = vsub.f32 %v998, %v1094
        %v1158 = vsub.f32 %v1001, %v1096
        %v1159 = vsub.f32 %v1004, %v1098
        %v1160 = vsub.f32 %v1007, %v1100
        %v1161 = vsub.f32 %v1010, %v1102
        %v1162 = vsub.f32 %v1013, %v1104
        %v1163 = vsub.f32 %v1016, %v1106
        %v1164 = vsub.f32 %v1019, %v1108
        %v1165 = vsub.f32 %v1022, %v1110
        %v1166 = vsub.f32 %v1025, %v1112
        %v1167 = vsub.f32 %v1028, %v1114
        %v1168 = vsub.f32 %v1031, %v1116
        %v1169 = vsub.f32 %v1034, %v1118
        %v1170 = vsub.f32 %v1037, %v1120
        %v1171 = vsub.f32 %v1040, %v1122
        %v1172 = vsub.f32 %v1043, %v1124
        %v1173 = vsub.f32 %v1046, %v1126
        %v1174 = vsub.f32 %v1049, %v1128
        %v1175 = vsub.f32 %v1052, %v1130
        %v1176 = vsub.f32 %v1055, %v1132
        %v1177 = vsub.f32 %v1058, %v1134
        %v1178 = vsub.f32 %v1061, %v1136
        %v1179 = vsub.f32 %v1064, %v1138
        %v1180 = vsub.f32 %v1067, %v1140
        %v1181 = vsub.f32 %v1070, %v1142
        %v1182 = vsub.f32 %v1073, %v1144
        %v1183 = vsub.f32 %v1076, %v1146
        %v1184 = vsub.f32 %v1079, %v1148
        %v1185 = vsub.f32 %v1082, %v1150
        %v1186 = vsub.f32 %v1085, %v1152
        %v1187 = vsub.f32 %v1088, %v1154
        %v1188 = vsub.f32 %v1091, %v1156
        %v1189 = vmul.f32 %v1157, 1.442695
        %v1190 = vpow.pop %v1189
        %v1191 = vmul.f32 %v1158, 1.442695
        %v1192 = vpow.pop %v1191
        %v1193 = vmul.f32 %v1159, 1.442695
        %v1194 = vpow.pop %v1193
        %v1195 = vmul.f32 %v1160, 1.442695
        %v1196 = vpow.pop %v1195
        %v1197 = vmul.f32 %v1161, 1.442695
        %v1198 = vpow.pop %v1197
        %v1199 = vmul.f32 %v1162, 1.442695
        %v1200 = vpow.pop %v1199
        %v1201 = vmul.f32 %v1163, 1.442695
        %v1202 = vpow.pop %v1201
        %v1203 = vmul.f32 %v1164, 1.442695
        %v1204 = vpow.pop %v1203
        %v1205 = vmul.f32 %v1165, 1.442695
        %v1206 = vpow.pop %v1205
        %v1207 = vmul.f32 %v1166, 1.442695
        %v1208 = vpow.pop %v1207
        %v1209 = vmul.f32 %v1167, 1.442695
        %v1210 = vpow.pop %v1209
        %v1211 = vmul.f32 %v1168, 1.442695
        %v1212 = vpow.pop %v1211
        %v1213 = vmul.f32 %v1169, 1.442695
        %v1214 = vpow.pop %v1213
        %v1215 = vmul.f32 %v1170, 1.442695
        %v1216 = vpow.pop %v1215
        %v1217 = vmul.f32 %v1171, 1.442695
        %v1218 = vpow.pop %v1217
        %v1219 = vmul.f32 %v1172, 1.442695
        %v1220 = vpow.pop %v1219
        %v1221 = vmul.f32 %v1173, 1.442695
        %v1222 = vpow.pop %v1221
        %v1223 = vmul.f32 %v1174, 1.442695
        %v1224 = vpow.pop %v1223
        %v1225 = vmul.f32 %v1175, 1.442695
        %v1226 = vpow.pop %v1225
        %v1227 = vmul.f32 %v1176, 1.442695
        %v1228 = vpow.pop %v1227
        %v1229 = vmul.f32 %v1177, 1.442695
        %v1230 = vpow.pop %v1229
        %v1231 = vmul.f32 %v1178, 1.442695
        %v1232 = vpow.pop %v1231
        %v1233 = vmul.f32 %v1179, 1.442695
        %v1234 = vpow.pop %v1233
        %v1235 = vmul.f32 %v1180, 1.442695
        %v1236 = vpow.pop %v1235
        %v1237 = vmul.f32 %v1181, 1.442695
        %v1238 = vpow.pop %v1237
        %v1239 = vmul.f32 %v1182, 1.442695
        %v1240 = vpow.pop %v1239
        %v1241 = vmul.f32 %v1183, 1.442695
        %v1242 = vpow.pop %v1241
        %v1243 = vmul.f32 %v1184, 1.442695
        %v1244 = vpow.pop %v1243
        %v1245 = vmul.f32 %v1185, 1.442695
        %v1246 = vpow.pop %v1245
        %v1247 = vmul.f32 %v1186, 1.442695
        %v1248 = vpow.pop %v1247
        %v1249 = vmul.f32 %v1187, 1.442695
        %v1250 = vpow.pop %v1249
        %v1251 = vmul.f32 %v1188, 1.442695
        %v1252 = vpow.pop %v1251
        %1253 = vadd.xlane.f32.xlu0 %v1190
        %v1254 = vpop.xlane.xlu0 %1253
        %1255 = vadd.xlane.f32.xlu0 %v1192
        %v1256 = vpop.xlane.xlu0 %1255
        %1257 = vadd.xlane.f32.xlu0 %v1194
        %v1258 = vpop.xlane.xlu0 %1257
        %1259 = vadd.xlane.f32.xlu0 %v1196
        %v1260 = vpop.xlane.xlu0 %1259
        %1261 = vadd.xlane.f32.xlu0 %v1198
        %v1262 = vpop.xlane.xlu0 %1261
        %1263 = vadd.xlane.f32.xlu0 %v1200
        %v1264 = vpop.xlane.xlu0 %1263
        %1265 = vadd.xlane.f32.xlu0 %v1202
        %v1266 = vpop.xlane.xlu0 %1265
        %1267 = vadd.xlane.f32.xlu0 %v1204
        %v1268 = vpop.xlane.xlu0 %1267
        %1269 = vadd.xlane.f32.xlu0 %v1206
        %v1270 = vpop.xlane.xlu0 %1269
        %1271 = vadd.xlane.f32.xlu0 %v1208
        %v1272 = vpop.xlane.xlu0 %1271
        %1273 = vadd.xlane.f32.xlu0 %v1210
        %v1274 = vpop.xlane.xlu0 %1273
        %1275 = vadd.xlane.f32.xlu0 %v1212
        %v1276 = vpop.xlane.xlu0 %1275
        %1277 = vadd.xlane.f32.xlu0 %v1214
        %v1278 = vpop.xlane.xlu0 %1277
        %1279 = vadd.xlane.f32.xlu0 %v1216
        %v1280 = vpop.xlane.xlu0 %1279
        %1281 = vadd.xlane.f32.xlu0 %v1218
        %v1282 = vpop.xlane.xlu0 %1281
        %1283 = vadd.xlane.f32.xlu0 %v1220
        %v1284 = vpop.xlane.xlu0 %1283
        %1285 = vadd.xlane.f32.xlu0 %v1222
        %v1286 = vpop.xlane.xlu0 %1285
        %1287 = vadd.xlane.f32.xlu0 %v1224
        %v1288 = vpop.xlane.xlu0 %1287
        %1289 = vadd.xlane.f32.xlu0 %v1226
        %v1290 = vpop.xlane.xlu0 %1289
        %1291 = vadd.xlane.f32.xlu0 %v1228
        %v1292 = vpop.xlane.xlu0 %1291
        %1293 = vadd.xlane.f32.xlu0 %v1230
        %v1294 = vpop.xlane.xlu0 %1293
        %1295 = vadd.xlane.f32.xlu0 %v1232
        %v1296 = vpop.xlane.xlu0 %1295
        %1297 = vadd.xlane.f32.xlu0 %v1234
        %v1298 = vpop.xlane.xlu0 %1297
        %1299 = vadd.xlane.f32.xlu0 %v1236
        %v1300 = vpop.xlane.xlu0 %1299
        %1301 = vadd.xlane.f32.xlu0 %v1238
        %v1302 = vpop.xlane.xlu0 %1301
        %1303 = vadd.xlane.f32.xlu0 %v1240
        %v1304 = vpop.xlane.xlu0 %1303
        %1305 = vadd.xlane.f32.xlu0 %v1242
        %v1306 = vpop.xlane.xlu0 %1305
        %1307 = vadd.xlane.f32.xlu0 %v1244
        %v1308 = vpop.xlane.xlu0 %1307
        %1309 = vadd.xlane.f32.xlu0 %v1246
        %v1310 = vpop.xlane.xlu0 %1309
        %1311 = vadd.xlane.f32.xlu0 %v1248
        %v1312 = vpop.xlane.xlu0 %1311
        %1313 = vadd.xlane.f32.xlu0 %v1250
        %v1314 = vpop.xlane.xlu0 %1313
        %1315 = vadd.xlane.f32.xlu0 %v1252
        %v1316 = vpop.xlane.xlu0 %1315
        %v1317 = vrcp.pop %v1254
        %v1318 = vrcp.pop %v1256
        %v1319 = vrcp.pop %v1258
        %v1320 = vrcp.pop %v1260
        %v1321 = vrcp.pop %v1262
        %v1322 = vrcp.pop %v1264
        %v1323 = vrcp.pop %v1266
        %v1324 = vrcp.pop %v1268
        %v1325 = vrcp.pop %v1270
        %v1326 = vrcp.pop %v1272
        %v1327 = vrcp.pop %v1274
        %v1328 = vrcp.pop %v1276
        %v1329 = vrcp.pop %v1278
        %v1330 = vrcp.pop %v1280
        %v1331 = vrcp.pop %v1282
        %v1332 = vrcp.pop %v1284
        %v1333 = vrcp.pop %v1286
        %v1334 = vrcp.pop %v1288
        %v1335 = vrcp.pop %v1290
        %v1336 = vrcp.pop %v1292
        %v1337 = vrcp.pop %v1294
        %v1338 = vrcp.pop %v1296
        %v1339 = vrcp.pop %v1298
        %v1340 = vrcp.pop %v1300
        %v1341 = vrcp.pop %v1302
        %v1342 = vrcp.pop %v1304
        %v1343 = vrcp.pop %v1306
        %v1344 = vrcp.pop %v1308
        %v1345 = vrcp.pop %v1310
        %v1346 = vrcp.pop %v1312
        %v1347 = vrcp.pop %v1314
        %v1348 = vrcp.pop %v1316
        %v1349 = vmul.f32 %v1190, %v1317
        %v1350 = vmul.f32 %v1192, %v1318
        %v1351 = vmul.f32 %v1194, %v1319
        %v1352 = vmul.f32 %v1196, %v1320
        %v1353 = vmul.f32 %v1198, %v1321
        %v1354 = vmul.f32 %v1200, %v1322
        %v1355 = vmul.f32 %v1202, %v1323
        %v1356 = vmul.f32 %v1204, %v1324
        %v1357 = vmul.f32 %v1206, %v1325
        %v1358 = vmul.f32 %v1208, %v1326
        %v1359 = vmul.f32 %v1210, %v1327
        %v1360 = vmul.f32 %v1212, %v1328
        %v1361 = vmul.f32 %v1214, %v1329
        %v1362 = vmul.f32 %v1216, %v1330
        %v1363 = vmul.f32 %v1218, %v1331
        %v1364 = vmul.f32 %v1220, %v1332
        %v1365 = vmul.f32 %v1222, %v1333
        %v1366 = vmul.f32 %v1224, %v1334
        %v1367 = vmul.f32 %v1226, %v1335
        %v1368 = vmul.f32 %v1228, %v1336
        %v1369 = vmul.f32 %v1230, %v1337
        %v1370 = vmul.f32 %v1232, %v1338
        %v1371 = vmul.f32 %v1234, %v1339
        %v1372 = vmul.f32 %v1236, %v1340
        %v1373 = vmul.f32 %v1238, %v1341
        %v1374 = vmul.f32 %v1240, %v1342
        %v1375 = vmul.f32 %v1242, %v1343
        %v1376 = vmul.f32 %v1244, %v1344
        %v1377 = vmul.f32 %v1246, %v1345
        %v1378 = vmul.f32 %v1248, %v1346
        %v1379 = vmul.f32 %v1250, %v1347
        %v1380 = vmul.f32 %v1252, %v1348
        %1381 = vst [vmem:[%s326] sm:$0xff] %v1349
        %1382 = vst [vmem:[%s326 + $0x8] sm:$0xff] %v1350
        %1383 = vst [vmem:[%s326 + $0x10] sm:$0xff] %v1351
        %1384 = vst [vmem:[%s326 + $0x18] sm:$0xff] %v1352
        %1385 = vst [vmem:[%s326 + $0x20] sm:$0xff] %v1353
        %1386 = vst [vmem:[%s326 + $0x28] sm:$0xff] %v1354
        %1387 = vst [vmem:[%s326 + $0x30] sm:$0xff] %v1355
        %1388 = vst [vmem:[%s326 + $0x38] sm:$0xff] %v1356
        %1389 = vst [vmem:[%s326 + $0x40] sm:$0xff] %v1357
        %1390 = vst [vmem:[%s326 + $0x48] sm:$0xff] %v1358
        %1391 = vst [vmem:[%s326 + $0x50] sm:$0xff] %v1359
        %1392 = vst [vmem:[%s326 + $0x58] sm:$0xff] %v1360
        %1393 = vst [vmem:[%s326 + $0x60] sm:$0xff] %v1361
        %1394 = vst [vmem:[%s326 + $0x68] sm:$0xff] %v1362
        %1395 = vst [vmem:[%s326 + $0x70] sm:$0xff] %v1363
        %1396 = vst [vmem:[%s326 + $0x78] sm:$0xff] %v1364
        %1397 = vst [vmem:[%s326 + $0x80] sm:$0xff] %v1365
        %1398 = vst [vmem:[%s326 + $0x88] sm:$0xff] %v1366
        %1399 = vst [vmem:[%s326 + $0x90] sm:$0xff] %v1367
        %1400 = vst [vmem:[%s326 + $0x98] sm:$0xff] %v1368
        %1401 = vst [vmem:[%s326 + $0xa0] sm:$0xff] %v1369
        %1402 = vst [vmem:[%s326 + $0xa8] sm:$0xff] %v1370
        %1403 = vst [vmem:[%s326 + $0xb0] sm:$0xff] %v1371
        %1404 = vst [vmem:[%s326 + $0xb8] sm:$0xff] %v1372
        %1405 = vst [vmem:[%s326 + $0xc0] sm:$0xff] %v1373
        %1406 = vst [vmem:[%s326 + $0xc8] sm:$0xff] %v1374
        %1407 = vst [vmem:[%s326 + $0xd0] sm:$0xff] %v1375
        %1408 = vst [vmem:[%s326 + $0xd8] sm:$0xff] %v1376
        %1409 = vst [vmem:[%s326 + $0xe0] sm:$0xff] %v1377
        %1410 = vst [vmem:[%s326 + $0xe8] sm:$0xff] %v1378
        %1411 = vst [vmem:[%s326 + $0xf0] sm:$0xff] %v1379
        %1412 = vst [vmem:[%s326 + $0xf8] sm:$0xff] %v1380
        %s1413 = sand.u32 %s225, 1
        %s1414 = scalar_lea.sflag [#allocation3], %s1413
        %s1415 = sand.u32 %s225, 1
        %s1416 = smul.addr %s1415, 256
        %s1417 = scalar_lea.vmem [#allocation2], %s1416
        // Predicated region
        $region57: #{tpu_custom_call.1} parent=55 // pred_check
          %p1418 = pneg %p235
        $region58: #{tpu_custom_call.1} parent=55 // pred_check_branch
          %1420 = sbr.rel (%p1418) target = $region60
        $region59: #{tpu_custom_call.1} parent=55 // pred_region
          %s1421 = smul.u32 32, %s23
          %1423 = vsyncadd %s1414, 0
          %s1424 = smul.addr %s1421, 8
          %s1425 = scalar_lea.hbm %s9, %s1424
          %s1426 = sshll.u32 %s1417, 4
          %s1427 = int_to_ptr.vmem [resolvable:$true] %s1426
          %s1428 = sshll.u32 %s1425, 4
          %s1429 = int_to_ptr.hbm [resolvable:$true] %s1428
          %1434 = dma.vmem_to_hbm [thread:$0]  %s1427, 4096, %s1429, %s1414, 128, 128, 8
        $region60: #{tpu_custom_call.1} parent=55 // pred_fallthru
          _
      $region56: #{tpu_custom_call.1} parent=5 // pred_fallthru
        _
      %p1435 = scmp.le.s32.totalorder 2, %s18
      // Predicated region
      $region61: #{tpu_custom_call.1} parent=5 // pred_check
        %p1436 = pneg %p1435
      $region62: #{tpu_custom_call.1} parent=5 // pred_check_branch
        %1438 = sbr.rel (%p1436) target = $region64
      $region63: #{tpu_custom_call.1} parent=5 // pred_region
        %s1439 = ssub.s32 %s18, 2
        // Predicated region
        $region65: #{tpu_custom_call.1} parent=63 // pred_check
          %p1440 = pneg %p241
        $region66: #{tpu_custom_call.1} parent=63 // pred_check_branch
          %1442 = sbr.rel (%p1440) target = $region68
        $region67: #{tpu_custom_call.1} parent=63 // pred_region
          %s1443 = sand.u32 %s226, 1
          %s1444 = scalar_lea.sflag [#allocation3], %s1443
          %s1445 = sand.u32 %s226, 1
          %s1446 = smul.addr %s1445, 256
          %s1447 = scalar_lea.vmem [#allocation2], %s1446
          %1449 = dma.done %s1444, 4096
        $region68: #{tpu_custom_call.1} parent=63 // pred_fallthru
          _
      $region64: #{tpu_custom_call.1} parent=5 // pred_fallthru
        _
    $region6: #{tpu_custom_call.1} parent=1 // loop_footer
      %s22 = sadd.s32 1, %s18
    $region7: #{tpu_custom_call.1} parent=1 // loop_footer_branch
      %17 = sbr.rel target = $region3
    $region8: #{tpu_custom_call.1} parent=1 // loop_exit
      _
    %1450 = vsyncpa [#allocation3], 1
    %s1451 = scalar_lea.sflag [#allocation3], 1
    %1452 = vsyncpa %s1451, 1

</llo_original>
